<compile_context>
chip_gen: v7x
topology: tpu7x:2x2x1
jax: 0.10.0
libtpu: 0.0.40
codegen_flags: <defaults>
</compile_context>

<pallas_src>
import functools

import jax
import jax.numpy as jnp
from jax import lax
from jax.experimental import pallas as pl
from jax.experimental.pallas import tpu as pltpu


def _round_up(v, m):
    return -(-v // m) * m


def gcn_kernel(xwt_ref, at_ref, dinv_ref, b1_ref, w2t_ref, b2_ref, o_ref, *, n_cls):
    # Aggregation: (D^{-1/2} X W1)^T @ (A+I)^T for this column tile of nodes.
    # int8 0/1 counts upcast to bf16 (exact) x bf16 features, f32 MXU accumulate.
    agg = jnp.dot(xwt_ref[...], at_ref[...].astype(jnp.bfloat16),
                  preferred_element_type=jnp.float32)              # (16, tm)
    # Left D^{-1/2} (per output node = per lane), bias, ReLU.
    # dropout(p=0.5) in eval mode == identity.
    h = jnp.maximum(agg * dinv_ref[...] + b1_ref[...], 0.0)        # (16, tm)
    # Classifier (transposed): W2^T @ h -> (c8, tm), bf16 operands, f32 acc.
    z = jnp.dot(w2t_ref[...], h.astype(jnp.bfloat16),
                preferred_element_type=jnp.float32) + b2_ref[...]  # (c8, tm)
    # log_softmax over the class (sublane) axis; padded classes masked to -inf
    # so normalization only sees the real n_cls classes.
    cls = lax.broadcasted_iota(jnp.int32, z.shape, 0)
    z = jnp.where(cls < n_cls, z, -jnp.inf)
    m = jnp.max(z, axis=0, keepdims=True)
    s = z - m
    lse = jnp.log(jnp.sum(jnp.exp(s), axis=0, keepdims=True))
    o_ref[...] = s - lse


def gcn_forward(x, a_t, dinv, w1, b1, w2, b2, *, tile_m=512):
    """x: (N, 16) f32; a_t: (N, N) int8 transposed (A+I) counts; dinv: (N,) f32."""
    n, _ = x.shape
    f_hid = w1.shape[1]
    n_cls = w2.shape[1]

    # ---- host-side (plain JAX) preprocessing --------------------------------
    # Hoisted X @ W1 with the right-hand D^{-1/2} folded into the node rows,
    # stored transposed (f_hid, N) in bf16: the single grid-invariant feature
    # input, half the HBM/VMEM footprint of f32 X.
    xwt = (dinv[:, None] * jnp.dot(x, w1)).T.astype(jnp.bfloat16)   # (16, N)

    # Node tile: multiple of 128 (lane-dense A block + lane-dense output store;
    # also a superset of int8 sublane packing). Keep >= 2 tiles when possible so
    # v7x's two TensorCores both get work (single-TC chips could use 1 tile).
    tm = max(128, min(tile_m, n))
    tm = _round_up(tm, 128)
    n_pad = _round_up(n, tm)
    if n_pad // tm == 1 and n_pad % 256 == 0:
        tm = n_pad // 2
    grid = (n_pad // tm,)

    # Pad the transposed adjacency / dinv along the output-node (lane) axis.
    at_p = a_t
    dinv_row = dinv.reshape(1, n).astype(jnp.float32)
    if n_pad != n:
        at_p = jnp.zeros((n, n_pad), a_t.dtype).at[:, :n].set(a_t)
        dinv_row = jnp.zeros((1, n_pad), jnp.float32).at[:, :n].set(dinv_row)

    # Class axis padded 5 -> 8 on the sublane axis only (not 128 lanes).
    c8 = _round_up(n_cls, 8)
    w2t = jnp.zeros((c8, f_hid), jnp.float32).at[:n_cls, :].set(w2.T)
    w2t = w2t.astype(jnp.bfloat16)
    b2c = jnp.zeros((c8, 1), jnp.float32).at[:n_cls, 0].set(b2)
    b1c = b1.reshape(f_hid, 1).astype(jnp.float32)

    grid_spec = pl.GridSpec(
        grid=grid,
        in_specs=[
            pl.BlockSpec((f_hid, n), lambda i: (0, 0)),   # XW^T (bf16, invariant)
            pl.BlockSpec((n, tm), lambda i: (0, i)),      # (A+I)^T int8 column tile
            pl.BlockSpec((1, tm), lambda i: (0, i)),      # dinv for this node tile
            pl.BlockSpec((f_hid, 1), lambda i: (0, 0)),   # b1 (column)
            pl.BlockSpec((c8, f_hid), lambda i: (0, 0)),  # W2^T (padded, bf16)
            pl.BlockSpec((c8, 1), lambda i: (0, 0)),      # b2 (padded, column)
        ],
        out_specs=pl.BlockSpec((c8, tm), lambda i: (0, i)),
    )

    out_t = pl.pallas_call(
        functools.partial(gcn_kernel, n_cls=n_cls),
        out_shape=jax.ShapeDtypeStruct((c8, n_pad), jnp.float32),
        grid_spec=grid_spec,
        compiler_params=pltpu.CompilerParams(
            # Node tiles are independent -> shard across both TCs on v7x.
            dimension_semantics=("parallel",),
            # ~2x(tm x N) int8 A buffers + small invariants; re-derive when
            # scaling N / tile_m (v7x has only 64 MiB physical VMEM).
            vmem_limit_bytes=32 * 1024 * 1024,
        ),
    )(xwt, at_p, dinv_row, b1c, w2t, b2c)

    # Padded class rows hold -inf and padded node columns hold garbage; both
    # are sliced off here — do not consume the raw (c8, n_pad) buffer directly.
    return out_t[:n_cls, :n].T


def build_adjacency_t(edge_index, num_nodes):
    """Transposed (A + I) edge-count matrix (int8, exact) plus D^{-1/2}.

    a_t[src, dst] = multiplicity of edge src -> dst (plus one self loop), so the
    aggregation is the standard-orientation matmul XW^T @ a_t. Counts are small
    integers (< 128 assumed), so int8 and bf16 represent them exactly.
    """
    # TODO(synk): at large N/E a gather-based sparse SpMM (scalar-prefetched
    # edge lists) should replace this dense O(N^2) adjacency.
    src, dst = edge_index[0], edge_index[1]
    loop = jnp.arange(num_nodes, dtype=src.dtype)
    src = jnp.concatenate([src, loop])
    dst = jnp.concatenate([dst, loop])
    a_t = jnp.zeros((num_nodes, num_nodes), jnp.float32).at[src, dst].add(1.0)
    deg = a_t.sum(axis=0)  # row sums of A (in-degree + 1), as in GCN normalization
    dinv = jnp.where(deg > 0, 1.0 / jnp.sqrt(deg), 0.0)
    return a_t.astype(jnp.int8), dinv


if __name__ == "__main__":
    key = jax.random.PRNGKey(0)
    k_x, k_e, k_w1, k_b1, k_w2, k_b2 = jax.random.split(key, 6)

    N = 1024       # number of graph nodes (2 node tiles of 512)
    F_IN = 16      # GCNConv in_channels
    F_HID = 16     # GCNConv out_channels
    N_CLS = 5      # Linear(16, 5)
    E = 4096       # number of directed edges

    x = jax.random.normal(k_x, (N, F_IN), dtype=jnp.float32)
    edge_index = jax.random.randint(k_e, (2, E), 0, N, dtype=jnp.int32)

    w1 = jax.random.normal(k_w1, (F_IN, F_HID), dtype=jnp.float32) * 0.1
    b1 = jax.random.normal(k_b1, (F_HID,), dtype=jnp.float32) * 0.1
    w2 = jax.random.normal(k_w2, (F_HID, N_CLS), dtype=jnp.float32) * 0.1
    b2 = jax.random.normal(k_b2, (N_CLS,), dtype=jnp.float32) * 0.1

    a_t, dinv = build_adjacency_t(edge_index, N)

    out = gcn_forward(x, a_t, dinv, w1, b1, w2, b2, tile_m=512)
    out = jax.block_until_ready(out)

    # sanity: shape + rows sum to 1 in probability space
    assert out.shape == (N, N_CLS)
    assert jnp.allclose(jnp.exp(out).sum(axis=1), 1.0, atol=1e-4)

    # reference mirroring the kernel's quantization (bf16 XW / h / W2; exact A)
    a_f = a_t.astype(jnp.float32).T                                   # (A + I), f32
    xw_q = (dinv[:, None] * jnp.dot(x, w1)).astype(jnp.bfloat16).astype(jnp.float32)
    h_ref = jnp.maximum(
        dinv[:, None] * jnp.dot(a_f, xw_q, precision=lax.Precision.HIGHEST)
        + b1[None, :], 0.0)
    z_ref = jnp.dot(h_ref.astype(jnp.bfloat16).astype(jnp.float32),
                    w2.astype(jnp.bfloat16).astype(jnp.float32),
                    precision=lax.Precision.HIGHEST) + b2[None, :]
    ref = jax.nn.log_softmax(z_ref, axis=1)
    assert jnp.allclose(out, ref, atol=2e-2, rtol=2e-2), float(
        jnp.max(jnp.abs(out - ref)))

    print("KERNEL_OK")
</pallas_src>

<mosaic_0001>
module attributes {stable_mosaic.version = 11 : i64} {
  func.func @gcn_kernel(%arg0: i32, %arg1: memref<16x1024xbf16, #tpu.memory_space<vmem>>, %arg2: memref<1024x512xi8, #tpu.memory_space<vmem>>, %arg3: memref<1x512xf32, #tpu.memory_space<vmem>>, %arg4: memref<16x1xf32, #tpu.memory_space<vmem>>, %arg5: memref<8x16xbf16, #tpu.memory_space<vmem>>, %arg6: memref<8x1xf32, #tpu.memory_space<vmem>>, %arg7: memref<8x512xf32, #tpu.memory_space<vmem>>) attributes {dimension_semantics = [#tpu.dimension_semantics<parallel>], iteration_bounds = array<i64: 2>, scalar_prefetch = 0 : i64, scratch_operands = 0 : i64, tpu.core_type = #tpu.core_type<tc>, window_params = [{pipeline_mode = #tpu.pipeline_mode<synchronous>, transform_indices = @transform_0, window_bounds = array<i64: 16, 1024>}, {transform_indices = @transform_1, window_bounds = array<i64: 1024, 512>}, {transform_indices = @transform_2, window_bounds = array<i64: 1, 512>}, {pipeline_mode = #tpu.pipeline_mode<synchronous>, transform_indices = @transform_3, window_bounds = array<i64: 16, 1>}, {pipeline_mode = #tpu.pipeline_mode<synchronous>, transform_indices = @transform_4, window_bounds = array<i64: 8, 16>}, {pipeline_mode = #tpu.pipeline_mode<synchronous>, transform_indices = @transform_5, window_bounds = array<i64: 8, 1>}, {transform_indices = @transform_6, window_bounds = array<i64: 8, 512>}]} {
    %c0 = arith.constant 0 : index
    %c0_0 = arith.constant 0 : index
    %0 = vector.load %arg1[%c0, %c0_0] : memref<16x1024xbf16, #tpu.memory_space<vmem>>, vector<16x1024xbf16>
    %c0_1 = arith.constant 0 : index
    %c0_2 = arith.constant 0 : index
    %1 = vector.load %arg2[%c0_1, %c0_2] : memref<1024x512xi8, #tpu.memory_space<vmem>>, vector<1024x512xi8>
    %2 = arith.sitofp %1 : vector<1024x512xi8> to vector<1024x512xbf16>
    %cst = arith.constant dense<0.000000e+00> : vector<16x512xf32>
    %3 = tpu.matmul %0, %2, %cst {dimension_numbers = #tpu.dot_dimension_numbers<[1], [0], [0], [1], [0, 0, 1, 1], [], []>} : vector<16x1024xbf16>, vector<1024x512xbf16>, vector<16x512xf32> -> vector<16x512xf32>
    %c0_3 = arith.constant 0 : index
    %c0_4 = arith.constant 0 : index
    %4 = vector.load %arg3[%c0_3, %c0_4] : memref<1x512xf32, #tpu.memory_space<vmem>>, vector<1x512xf32>
    %5 = vector.broadcast %4 : vector<1x512xf32> to vector<16x512xf32>
    %6 = arith.mulf %3, %5 : vector<16x512xf32>
    %c0_5 = arith.constant 0 : index
    %c0_6 = arith.constant 0 : index
    %7 = vector.load %arg4[%c0_5, %c0_6] : memref<16x1xf32, #tpu.memory_space<vmem>>, vector<16x1xf32>
    %8 = vector.broadcast %7 : vector<16x1xf32> to vector<16x512xf32>
    %9 = arith.addf %6, %8 : vector<16x512xf32>
    %cst_7 = arith.constant 0.000000e+00 : f32
    %10 = vector.broadcast %cst_7 : f32 to vector<16x512xf32>
    %11 = arith.maximumf %9, %10 : vector<16x512xf32>
    %c0_8 = arith.constant 0 : index
    %c0_9 = arith.constant 0 : index
    %12 = vector.load %arg5[%c0_8, %c0_9] : memref<8x16xbf16, #tpu.memory_space<vmem>>, vector<8x16xbf16>
    %13 = arith.truncf %11 : vector<16x512xf32> to vector<16x512xbf16>
    %cst_10 = arith.constant dense<0.000000e+00> : vector<8x512xf32>
    %14 = tpu.matmul %12, %13, %cst_10 {dimension_numbers = #tpu.dot_dimension_numbers<[1], [0], [0], [1], [0, 0, 1, 1], [], []>} : vector<8x16xbf16>, vector<16x512xbf16>, vector<8x512xf32> -> vector<8x512xf32>
    %c0_11 = arith.constant 0 : index
    %c0_12 = arith.constant 0 : index
    %15 = vector.load %arg6[%c0_11, %c0_12] : memref<8x1xf32, #tpu.memory_space<vmem>>, vector<8x1xf32>
    %16 = vector.broadcast %15 : vector<8x1xf32> to vector<8x512xf32>
    %17 = arith.addf %14, %16 : vector<8x512xf32>
    %18 = tpu.iota {dimensions = array<i32: 0>} : vector<8x512xi32>
    %c5_i32 = arith.constant 5 : i32
    %19 = vector.broadcast %c5_i32 : i32 to vector<8x512xi32>
    %20 = arith.cmpi slt, %18, %19 : vector<8x512xi32>
    %cst_13 = arith.constant 0xFF800000 : f32
    %21 = vector.broadcast %cst_13 : f32 to vector<8x512xf32>
    %22 = arith.select %20, %17, %21 : vector<8x512xi1>, vector<8x512xf32>
    %cst_14 = arith.constant dense<0xFF800000> : vector<512xf32>
    %23 = vector.multi_reduction <maximumf>, %22, %cst_14 [0] : vector<8x512xf32> to vector<512xf32>
    %24 = vector.shape_cast %23 : vector<512xf32> to vector<1x512xf32>
    %25 = vector.broadcast %24 : vector<1x512xf32> to vector<8x512xf32>
    %26 = arith.subf %22, %25 : vector<8x512xf32>
    %27 = math.exp %26 : vector<8x512xf32>
    %cst_15 = arith.constant dense<0.000000e+00> : vector<512xf32>
    %28 = vector.multi_reduction <add>, %27, %cst_15 [0] : vector<8x512xf32> to vector<512xf32>
    %29 = vector.shape_cast %28 : vector<512xf32> to vector<1x512xf32>
    %30 = math.log %29 : vector<1x512xf32>
    %31 = vector.broadcast %30 : vector<1x512xf32> to vector<8x512xf32>
    %32 = arith.subf %26, %31 : vector<8x512xf32>
    %c0_16 = arith.constant 0 : index
    %c0_17 = arith.constant 0 : index
    %33 = vector.load %arg7[%c0_16, %c0_17] : memref<8x512xf32, #tpu.memory_space<vmem>>, vector<8x512xf32>
    tpu.vector_store %arg7[%c0_16, %c0_17], %32 {strides = array<i32>} : memref<8x512xf32, #tpu.memory_space<vmem>>, vector<8x512xf32>,
    return
  }
  func.func @transform_0(%arg0: i32) -> (i32, i32) {
    %c0_i32 = arith.constant 0 : i32
    %c0_i32_0 = arith.constant 0 : i32
    %c0_i32_1 = arith.constant 0 : i32
    return %c0_i32, %c0_i32_0 : i32, i32
  }
  func.func @transform_1(%arg0: i32) -> (i32, i32) {
    %c0_i32 = arith.constant 0 : i32
    %c0_i32_0 = arith.constant 0 : i32
    return %c0_i32, %arg0 : i32, i32
  }
  func.func @transform_2(%arg0: i32) -> (i32, i32) {
    %c0_i32 = arith.constant 0 : i32
    %c0_i32_0 = arith.constant 0 : i32
    return %c0_i32, %arg0 : i32, i32
  }
  func.func @transform_3(%arg0: i32) -> (i32, i32) {
    %c0_i32 = arith.constant 0 : i32
    %c0_i32_0 = arith.constant 0 : i32
    %c0_i32_1 = arith.constant 0 : i32
    return %c0_i32, %c0_i32_0 : i32, i32
  }
  func.func @transform_4(%arg0: i32) -> (i32, i32) {
    %c0_i32 = arith.constant 0 : i32
    %c0_i32_0 = arith.constant 0 : i32
    %c0_i32_1 = arith.constant 0 : i32
    return %c0_i32, %c0_i32_0 : i32, i32
  }
  func.func @transform_5(%arg0: i32) -> (i32, i32) {
    %c0_i32 = arith.constant 0 : i32
    %c0_i32_0 = arith.constant 0 : i32
    %c0_i32_1 = arith.constant 0 : i32
    return %c0_i32, %c0_i32_0 : i32, i32
  }
  func.func @transform_6(%arg0: i32) -> (i32, i32) {
    %c0_i32 = arith.constant 0 : i32
    %c0_i32_0 = arith.constant 0 : i32
    return %c0_i32, %arg0 : i32, i32
  }
}

</mosaic_0001>

<llo_original>
// kernel: tpu_custom_call.1
$region0: #{tpu_custom_call.1}
  #allocation0 [shape = 'u32[]', space=smem, size = 0x4, offset = 0x4, fixed_abs, tag = 'smem constant byte address 0x4 - core index']
  #allocation1 [shape = 'u32[144,128]{1,0:T(1,128)}', space=vmem, size = 0x12000, scoped, tag = 'internal scratch']
  %s0 = inlined_call_operand.hbm [shape: bf16[16,1024], index: 0, kind: input, shape index: {}]
  %s1 = inlined_call_operand.hbm [shape: s8[1024,1024], index: 1, kind: input, shape index: {}]
  %s2 = inlined_call_operand.vmem [shape: f32[1,1024], index: 2, kind: input, shape index: {}]
  %s3 = inlined_call_operand.vmem [shape: f32[16,1], index: 3, kind: input, shape index: {}]
  %s4 = inlined_call_operand.vmem [shape: bf16[8,16], index: 4, kind: input, shape index: {}]
  %s5 = inlined_call_operand.vmem [shape: f32[8,1], index: 5, kind: input, shape index: {}]
  %s6 = inlined_call_operand.hbm [shape: f32[8,1024], index: 6, kind: output, shape index: {}]
  %s7 = sld [smem:[#allocation0]]
  $region65: #{tpu_custom_call.1} parent=0
    _
  %s9 = ssub.s32 1, %s7
  %s10 = scalar_select 0, %s9, %s7
  $region1: #{tpu_custom_call.1} parent=0
    #allocation2 [shape = 'u8[32768]{0}', space=vmem, size = 0x8000, scoped, tag = 'input window, operand 0, single buffered']
    #allocation3 [shape = 's32[2]{0}', space=sflag, size = 0x8, scoped, tag = 'scoped memory for tpu_custom_call.1']
    #allocation4 [shape = 's32[2]{0}', space=sflag, size = 0x8, scoped, tag = 'scoped memory for tpu_custom_call.1']
    #allocation5 [shape = 'u8[1048576]{0}', space=vmem, size = 0x100000, scoped, tag = 'input window, operand 1']
    #allocation6 [shape = 's32[2]{0}', space=sflag, size = 0x8, scoped, tag = 'scoped memory for tpu_custom_call.1']
    #allocation7 [shape = 'u8[32768]{0}', space=vmem, size = 0x8000, scoped, tag = 'output window, operand 0']
    %11 = vsyncpa [#allocation3], 0
    %12 = vsyncpa [#allocation6], 0
    %s13 = scalar_lea.sflag [#allocation6], 1
    %14 = vsyncpa %s13, 0
    %15 = vsyncpa [#allocation4], 0
    %s16 = scalar_lea.sflag [#allocation4], 1
    %17 = vsyncpa %s16, 0
    loop: start=0, step=1, limit=4
    $region2: #{tpu_custom_call.1} parent=1 // loop_pre_header
      _
    $region3: #{tpu_custom_call.1} parent=1 // loop_header
      %s19 = sphi 0, %s23
      %p20 = scmp.ge.s32.totalorder %s19, 4
      %s27 = sphi 0, %s27
      %s29 = sphi 0, %s27
      %s30 = sphi 0, %s29
      %s44 = sphi 0, %s30
      %s50 = sphi 0, %s52
      %s53 = sphi 0, %s50
      %s54 = sphi 0, %s53
      %s70 = sphi 0, %s54
      %s76 = sphi 0, %s78
      %s79 = sphi 0, %s76
      %s80 = sphi 0, %s79
      %s96 = sphi 0, %s80
      %s100 = sphi 0, %s100
      %s102 = sphi 0, %s100
      %s103 = sphi 0, %s102
      %s117 = sphi 0, %s103
      %s121 = sphi 0, %s121
      %s123 = sphi 0, %s121
      %s124 = sphi 0, %s123
      %s138 = sphi 0, %s124
      %s142 = sphi 0, %s142
      %s144 = sphi 0, %s142
      %s145 = sphi 0, %s144
      %s159 = sphi 0, %s145
      %s165 = sphi 0, %s167
      %s168 = sphi 0, %s165
      %s169 = sphi 0, %s168
      %s185 = sphi 0, %s169
    $region4: #{tpu_custom_call.1} parent=1 // loop_header_branch
      %22 = sbr.rel (%p20) target = $region8
    $region5: #{tpu_custom_call.1} parent=1 // loop_body
      %s24 = ssub.s32 %s19, 1
      %s25 = ssub.s32 %s19, 2
      %s26 = sadd.s32 %s19, 1
      %s28 = sadd.s32 %s27, 1
      %p31 = scmp.eq.s32.totalorder %s19, 1
      %p32 = scmp.ne.s32.totalorder %s27, %s29
      %p33 = scmp.eq.s32.totalorder %s19, 0
      %p34 = por %p32, %p33
      %p35 = scmp.ne.s32.totalorder %s27, %s29
      %p36 = scmp.eq.s32.totalorder %s24, 1
      %p37 = por %p35, %p36
      %p38 = scmp.ne.s32.totalorder %s29, %s30
      %p39 = scmp.eq.s32.totalorder %s24, 0
      %p40 = por %p38, %p39
      %p41 = scmp.ne.s32.totalorder %s29, %s30
      %p42 = scmp.eq.s32.totalorder %s25, 1
      %p43 = por %p41, %p42
      %p45 = scmp.ne.s32.totalorder %s30, %s44
      %p46 = scmp.eq.s32.totalorder %s25, 0
      %p47 = por %p45, %p46
      %s48 = ssub.s32 %s19, %s26
      %p49 = scmp.eq.s32.totalorder %s48, 0
      %s51 = sadd.s32 %s50, 1
      %s52 = scalar_select %p49, %s50, %s51
      %p55 = pneg %p49
      %p56 = scmp.eq.s32.totalorder %s19, 1
      %p57 = por %p55, %p56
      %p58 = scmp.ne.s32.totalorder %s50, %s53
      %p59 = scmp.eq.s32.totalorder %s19, 0
      %p60 = por %p58, %p59
      %p61 = scmp.ne.s32.totalorder %s50, %s53
      %p62 = scmp.eq.s32.totalorder %s24, 1
      %p63 = por %p61, %p62
      %p64 = scmp.ne.s32.totalorder %s53, %s54
      %p65 = scmp.eq.s32.totalorder %s24, 0
      %p66 = por %p64, %p65
      %p67 = scmp.ne.s32.totalorder %s53, %s54
      %p68 = scmp.eq.s32.totalorder %s25, 1
      %p69 = por %p67, %p68
      %p71 = scmp.ne.s32.totalorder %s54, %s70
      %p72 = scmp.eq.s32.totalorder %s25, 0
      %p73 = por %p71, %p72
      %s74 = ssub.s32 %s19, %s26
      %p75 = scmp.eq.s32.totalorder %s74, 0
      %s77 = sadd.s32 %s76, 1
      %s78 = scalar_select %p75, %s76, %s77
      %p81 = pneg %p75
      %p82 = scmp.eq.s32.totalorder %s19, 1
      %p83 = por %p81, %p82
      %p84 = scmp.ne.s32.totalorder %s76, %s79
      %p85 = scmp.eq.s32.totalorder %s19, 0
      %p86 = por %p84, %p85
      %p87 = scmp.ne.s32.totalorder %s76, %s79
      %p88 = scmp.eq.s32.totalorder %s24, 1
      %p89 = por %p87, %p88
      %p90 = scmp.ne.s32.totalorder %s79, %s80
      %p91 = scmp.eq.s32.totalorder %s24, 0
      %p92 = por %p90, %p91
      %p93 = scmp.ne.s32.totalorder %s79, %s80
      %p94 = scmp.eq.s32.totalorder %s25, 1
      %p95 = por %p93, %p94
      %p97 = scmp.ne.s32.totalorder %s80, %s96
      %p98 = scmp.eq.s32.totalorder %s25, 0
      %p99 = por %p97, %p98
      %s101 = sadd.s32 %s100, 1
      %p104 = scmp.eq.s32.totalorder %s19, 1
      %p105 = scmp.ne.s32.totalorder %s100, %s102
      %p106 = scmp.eq.s32.totalorder %s19, 0
      %p107 = por %p105, %p106
      %p108 = scmp.ne.s32.totalorder %s100, %s102
      %p109 = scmp.eq.s32.totalorder %s24, 1
      %p110 = por %p108, %p109
      %p111 = scmp.ne.s32.totalorder %s102, %s103
      %p112 = scmp.eq.s32.totalorder %s24, 0
      %p113 = por %p111, %p112
      %p114 = scmp.ne.s32.totalorder %s102, %s103
      %p115 = scmp.eq.s32.totalorder %s25, 1
      %p116 = por %p114, %p115
      %p118 = scmp.ne.s32.totalorder %s103, %s117
      %p119 = scmp.eq.s32.totalorder %s25, 0
      %p120 = por %p118, %p119
      %s122 = sadd.s32 %s121, 1
      %p125 = scmp.eq.s32.totalorder %s19, 1
      %p126 = scmp.ne.s32.totalorder %s121, %s123
      %p127 = scmp.eq.s32.totalorder %s19, 0
      %p128 = por %p126, %p127
      %p129 = scmp.ne.s32.totalorder %s121, %s123
      %p130 = scmp.eq.s32.totalorder %s24, 1
      %p131 = por %p129, %p130
      %p132 = scmp.ne.s32.totalorder %s123, %s124
      %p133 = scmp.eq.s32.totalorder %s24, 0
      %p134 = por %p132, %p133
      %p135 = scmp.ne.s32.totalorder %s123, %s124
      %p136 = scmp.eq.s32.totalorder %s25, 1
      %p137 = por %p135, %p136
      %p139 = scmp.ne.s32.totalorder %s124, %s138
      %p140 = scmp.eq.s32.totalorder %s25, 0
      %p141 = por %p139, %p140
      %s143 = sadd.s32 %s142, 1
      %p146 = scmp.eq.s32.totalorder %s19, 1
      %p147 = scmp.ne.s32.totalorder %s142, %s144
      %p148 = scmp.eq.s32.totalorder %s19, 0
      %p149 = por %p147, %p148
      %p150 = scmp.ne.s32.totalorder %s142, %s144
      %p151 = scmp.eq.s32.totalorder %s24, 1
      %p152 = por %p150, %p151
      %p153 = scmp.ne.s32.totalorder %s144, %s145
      %p154 = scmp.eq.s32.totalorder %s24, 0
      %p155 = por %p153, %p154
      %p156 = scmp.ne.s32.totalorder %s144, %s145
      %p157 = scmp.eq.s32.totalorder %s25, 1
      %p158 = por %p156, %p157
      %p160 = scmp.ne.s32.totalorder %s145, %s159
      %p161 = scmp.eq.s32.totalorder %s25, 0
      %p162 = por %p160, %p161
      %s163 = ssub.s32 %s19, %s26
      %p164 = scmp.eq.s32.totalorder %s163, 0
      %s166 = sadd.s32 %s165, 1
      %s167 = scalar_select %p164, %s165, %s166
      %p170 = pneg %p164
      %p171 = scmp.eq.s32.totalorder %s19, 1
      %p172 = por %p170, %p171
      %p173 = scmp.ne.s32.totalorder %s165, %s168
      %p174 = scmp.eq.s32.totalorder %s19, 0
      %p175 = por %p173, %p174
      %p176 = scmp.ne.s32.totalorder %s165, %s168
      %p177 = scmp.eq.s32.totalorder %s24, 1
      %p178 = por %p176, %p177
      %p179 = scmp.ne.s32.totalorder %s168, %s169
      %p180 = scmp.eq.s32.totalorder %s24, 0
      %p181 = por %p179, %p180
      %p182 = scmp.ne.s32.totalorder %s168, %s169
      %p183 = scmp.eq.s32.totalorder %s25, 1
      %p184 = por %p182, %p183
      %p186 = scmp.ne.s32.totalorder %s169, %s185
      %p187 = scmp.eq.s32.totalorder %s25, 0
      %p188 = por %p186, %p187
      %p189 = scmp.le.s32.totalorder 1, %s19
      %p190 = scmp.lt.s32.totalorder %s19, 3
      %p191 = pnand %p189, %p190
      %p192 = pneg %p191
      // Predicated region
      $region9: #{tpu_custom_call.1} parent=5 // pred_check
        _
      $region10: #{tpu_custom_call.1} parent=5 // pred_check_branch
        %194 = sbr.rel (%p191) target = $region12
      $region11: #{tpu_custom_call.1} parent=5 // pred_region
        %s195 = ssub.s32 %s19, 1
        // Predicated region
        $region13: #{tpu_custom_call.1} parent=11 // pred_check
          %p196 = pneg %p40
        $region14: #{tpu_custom_call.1} parent=11 // pred_check_branch
          %198 = sbr.rel (%p196) target = $region16
        $region15: #{tpu_custom_call.1} parent=11 // pred_region
          %s200 = ssub.s32 1024, 1024
          %201 = vsyncadd [#allocation3], %s200
          %s202 = sshll.u32 [#allocation2], 4
          %s203 = int_to_ptr.vmem [resolvable:$true] %s202
          %208 = dma.hbm_to_vmem [thread:$0]  %s0, 1024, %s203, [#allocation3], 512, 512, 32
        $region16: #{tpu_custom_call.1} parent=11 // pred_fallthru
          _
        // Predicated region
        $region17: #{tpu_custom_call.1} parent=11 // pred_check
          %p209 = pneg %p113
        $region18: #{tpu_custom_call.1} parent=11 // pred_check_branch
          %211 = sbr.rel (%p209) target = $region20
        $region19: #{tpu_custom_call.1} parent=11 // pred_region
          _
        $region20: #{tpu_custom_call.1} parent=11 // pred_fallthru
          _
        // Predicated region
        $region21: #{tpu_custom_call.1} parent=11 // pred_check
          %p212 = pneg %p134
        $region22: #{tpu_custom_call.1} parent=11 // pred_check_branch
          %214 = sbr.rel (%p212) target = $region24
        $region23: #{tpu_custom_call.1} parent=11 // pred_region
          _
        $region24: #{tpu_custom_call.1} parent=11 // pred_fallthru
          _
        // Predicated region
        $region25: #{tpu_custom_call.1} parent=11 // pred_check
          %p215 = pneg %p155
        $region26: #{tpu_custom_call.1} parent=11 // pred_check_branch
          %217 = sbr.rel (%p215) target = $region28
        $region27: #{tpu_custom_call.1} parent=11 // pred_region
          _
        $region28: #{tpu_custom_call.1} parent=11 // pred_fallthru
          _
      $region12: #{tpu_custom_call.1} parent=5 // pred_fallthru
        _
      %p218 = scmp.lt.s32.totalorder %s19, 2
      // Predicated region
      $region29: #{tpu_custom_call.1} parent=5 // pred_check
        %p219 = pneg %p218
      $region30: #{tpu_custom_call.1} parent=5 // pred_check_branch
        %221 = sbr.rel (%p219) target = $region32
      $region31: #{tpu_custom_call.1} parent=5 // pred_region
        // Predicated region
        $region33: #{tpu_custom_call.1} parent=31 // pred_check
          %p222 = pneg %p60
        $region34: #{tpu_custom_call.1} parent=31 // pred_check_branch
          %224 = sbr.rel (%p222) target = $region36
        $region35: #{tpu_custom_call.1} parent=31 // pred_region
          %s225 = sand.u32 %s50, 1
          %s226 = scalar_lea.sflag [#allocation6], %s225
          %s227 = sand.u32 %s50, 1
          %s228 = smul.addr %s227, 1024
          %s229 = scalar_lea.vmem [#allocation5], %s228
          %s230 = smul.u32 4, %s19
          %s232 = ssub.s32 16384, 16384
          %233 = vsyncadd %s226, %s232
          %s234 = smul.addr %s230, 128
          %s235 = scalar_lea.hbm %s1, %s234
          %s236 = sshll.u32 %s229, 4
          %s237 = int_to_ptr.vmem [resolvable:$true] %s236
          %242 = dma.hbm_to_vmem [thread:$0]  %s235, 16384, %s237, %s226, 1024, 512, 32
        $region36: #{tpu_custom_call.1} parent=31 // pred_fallthru
          _
        // Predicated region
        $region37: #{tpu_custom_call.1} parent=31 // pred_check
          %p243 = pneg %p86
        $region38: #{tpu_custom_call.1} parent=31 // pred_check_branch
          %245 = sbr.rel (%p243) target = $region40
        $region39: #{tpu_custom_call.1} parent=31 // pred_region
          %s246 = smul.u32 4, %s19
          %p247 = scmp.lt.s32.totalorder %s246, 7
          %s248 = scalar_select %p247, %s246, 7
          %s249 = scalar_lea.vmem %s2, %s248
          %s250 = smul.u32 4, %s19
        $region40: #{tpu_custom_call.1} parent=31 // pred_fallthru
          _
      $region32: #{tpu_custom_call.1} parent=5 // pred_fallthru
        _
      %p251 = scmp.le.s32.totalorder 1, %s19
      %p252 = scmp.lt.s32.totalorder %s19, 3
      %p253 = pnand %p251, %p252
      %p254 = pneg %p253
      // Predicated region
      $region41: #{tpu_custom_call.1} parent=5 // pred_check
        _
      $region42: #{tpu_custom_call.1} parent=5 // pred_check_branch
        %256 = sbr.rel (%p253) target = $region44
      $region43: #{tpu_custom_call.1} parent=5 // pred_region
        %s257 = ssub.s32 %s19, 1
        // Predicated region
        $region45: #{tpu_custom_call.1} parent=43 // pred_check
          %p258 = pneg %p40
        $region46: #{tpu_custom_call.1} parent=43 // pred_check_branch
          %260 = sbr.rel (%p258) target = $region48
        $region47: #{tpu_custom_call.1} parent=43 // pred_region
          %261 = dma.done [#allocation3], 1024
        $region48: #{tpu_custom_call.1} parent=43 // pred_fallthru
          _
        %s262 = sand.u32 %s53, 1
        %s263 = scalar_lea.sflag [#allocation6], %s262
        %s264 = sand.u32 %s53, 1
        %s265 = smul.addr %s264, 1024
        %s266 = scalar_lea.vmem [#allocation5], %s265
        // Predicated region
        $region49: #{tpu_custom_call.1} parent=43 // pred_check
          %p267 = pneg %p66
        $region50: #{tpu_custom_call.1} parent=43 // pred_check_branch
          %269 = sbr.rel (%p267) target = $region52
        $region51: #{tpu_custom_call.1} parent=43 // pred_region
          %270 = dma.done %s263, 16384
        $region52: #{tpu_custom_call.1} parent=43 // pred_fallthru
          _
        %p271 = pneg %p40
        %p272 = pneg %p37
        %s273 = sand.u32 %s53, 1
        %s274 = scalar_lea.sflag [#allocation6], %s273
        %s275 = sand.u32 %s53, 1
        %s276 = smul.addr %s275, 1024
        %s277 = scalar_lea.vmem [#allocation5], %s276
        %p278 = pneg %p66
        %p279 = pneg %p63
        %s280 = smul.u32 4, %s24
        %p281 = scmp.lt.s32.totalorder %s280, 7
        %s282 = scalar_select %p281, %s280, 7
        %s283 = scalar_lea.vmem %s2, %s282
        %p284 = pneg %p92
        %p285 = pneg %p89
        %p286 = pneg %p113
        %p287 = pneg %p110
        %p288 = pneg %p134
        %p289 = pneg %p131
        %p290 = pneg %p155
        %p291 = pneg %p152
        %p292 = pneg %p181
        %p293 = pneg %p178
        %s294 = sand.u32 %s168, 1
        %s295 = scalar_lea.sflag [#allocation4], %s294
        %s296 = sand.u32 %s168, 1
        %s297 = smul.addr %s296, 32
        %s298 = scalar_lea.vmem [#allocation7], %s297
        %s299 = smul.u32 4, %s24
        %s300 = smul.u32 4, %s24
        %p301 = scmp.lt.s32.totalorder %s300, 7
        %s302 = scalar_select %p301, %s300, 7
        %s303 = scalar_lea.vmem %s2, %s302
        %s304 = smul.u32 4, %s24
        %s305 = smul.u32 4, %s24
        %v307 = vld [vmem:[#allocation2] sm:$0xff]
        %v308 = vld [vmem:[#allocation2 + $0x8] sm:$0xff]
        %v309 = vld [vmem:[#allocation2 + $0x10] sm:$0xff]
        %v310 = vld [vmem:[#allocation2 + $0x18] sm:$0xff]
        %v311 = vld [vmem:[#allocation2 + $0x20] sm:$0xff]
        %v312 = vld [vmem:[#allocation2 + $0x28] sm:$0xff]
        %v313 = vld [vmem:[#allocation2 + $0x30] sm:$0xff]
        %v314 = vld [vmem:[#allocation2 + $0x38] sm:$0xff]
        %v315 = vld [vmem:[%s266] sm:$0xff]
        %v316 = vld [vmem:[%s266 + $0x8] sm:$0xff]
        %v317 = vld [vmem:[%s266 + $0x10] sm:$0xff]
        %v318 = vld [vmem:[%s266 + $0x18] sm:$0xff]
        %v319 = vld [vmem:[%s266 + $0x20] sm:$0xff]
        %v320 = vld [vmem:[%s266 + $0x28] sm:$0xff]
        %v321 = vld [vmem:[%s266 + $0x30] sm:$0xff]
        %v322 = vld [vmem:[%s266 + $0x38] sm:$0xff]
        %v323 = vld [vmem:[%s266 + $0x40] sm:$0xff]
        %v324 = vld [vmem:[%s266 + $0x48] sm:$0xff]
        %v325 = vld [vmem:[%s266 + $0x50] sm:$0xff]
        %v326 = vld [vmem:[%s266 + $0x58] sm:$0xff]
        %v327 = vld [vmem:[%s266 + $0x60] sm:$0xff]
        %v328 = vld [vmem:[%s266 + $0x68] sm:$0xff]
        %v329 = vld [vmem:[%s266 + $0x70] sm:$0xff]
        %v330 = vld [vmem:[%s266 + $0x78] sm:$0xff]
        %v331 = vld [vmem:[%s266 + $0x80] sm:$0xff]
        %v332 = vld [vmem:[%s266 + $0x88] sm:$0xff]
        %v333 = vld [vmem:[%s266 + $0x90] sm:$0xff]
        %v334 = vld [vmem:[%s266 + $0x98] sm:$0xff]
        %v335 = vld [vmem:[%s266 + $0xa0] sm:$0xff]
        %v336 = vld [vmem:[%s266 + $0xa8] sm:$0xff]
        %v337 = vld [vmem:[%s266 + $0xb0] sm:$0xff]
        %v338 = vld [vmem:[%s266 + $0xb8] sm:$0xff]
        %v339 = vld [vmem:[%s266 + $0xc0] sm:$0xff]
        %v340 = vld [vmem:[%s266 + $0xc8] sm:$0xff]
        %v341 = vld [vmem:[%s266 + $0xd0] sm:$0xff]
        %v342 = vld [vmem:[%s266 + $0xd8] sm:$0xff]
        %v343 = vld [vmem:[%s266 + $0xe0] sm:$0xff]
        %v344 = vld [vmem:[%s266 + $0xe8] sm:$0xff]
        %v345 = vld [vmem:[%s266 + $0xf0] sm:$0xff]
        %v346 = vld [vmem:[%s266 + $0xf8] sm:$0xff]
        %v347 = vld [vmem:[%s266 + $0x100] sm:$0xff]
        %v348 = vld [vmem:[%s266 + $0x108] sm:$0xff]
        %v349 = vld [vmem:[%s266 + $0x110] sm:$0xff]
        %v350 = vld [vmem:[%s266 + $0x118] sm:$0xff]
        %v351 = vld [vmem:[%s266 + $0x120] sm:$0xff]
        %v352 = vld [vmem:[%s266 + $0x128] sm:$0xff]
        %v353 = vld [vmem:[%s266 + $0x130] sm:$0xff]
        %v354 = vld [vmem:[%s266 + $0x138] sm:$0xff]
        %v355 = vld [vmem:[%s266 + $0x140] sm:$0xff]
        %v356 = vld [vmem:[%s266 + $0x148] sm:$0xff]
        %v357 = vld [vmem:[%s266 + $0x150] sm:$0xff]
        %v358 = vld [vmem:[%s266 + $0x158] sm:$0xff]
        %v359 = vld [vmem:[%s266 + $0x160] sm:$0xff]
        %v360 = vld [vmem:[%s266 + $0x168] sm:$0xff]
        %v361 = vld [vmem:[%s266 + $0x170] sm:$0xff]
        %v362 = vld [vmem:[%s266 + $0x178] sm:$0xff]
        %v363 = vld [vmem:[%s266 + $0x180] sm:$0xff]
        %v364 = vld [vmem:[%s266 + $0x188] sm:$0xff]
        %v365 = vld [vmem:[%s266 + $0x190] sm:$0xff]
        %v366 = vld [vmem:[%s266 + $0x198] sm:$0xff]
        %v367 = vld [vmem:[%s266 + $0x1a0] sm:$0xff]
        %v368 = vld [vmem:[%s266 + $0x1a8] sm:$0xff]
        %v369 = vld [vmem:[%s266 + $0x1b0] sm:$0xff]
        %v370 = vld [vmem:[%s266 + $0x1b8] sm:$0xff]
        %v371 = vld [vmem:[%s266 + $0x1c0] sm:$0xff]
        %v372 = vld [vmem:[%s266 + $0x1c8] sm:$0xff]
        %v373 = vld [vmem:[%s266 + $0x1d0] sm:$0xff]
        %v374 = vld [vmem:[%s266 + $0x1d8] sm:$0xff]
        %v375 = vld [vmem:[%s266 + $0x1e0] sm:$0xff]
        %v376 = vld [vmem:[%s266 + $0x1e8] sm:$0xff]
        %v377 = vld [vmem:[%s266 + $0x1f0] sm:$0xff]
        %v378 = vld [vmem:[%s266 + $0x1f8] sm:$0xff]
        %v379 = vld [vmem:[%s266 + $0x200] sm:$0xff]
        %v380 = vld [vmem:[%s266 + $0x208] sm:$0xff]
        %v381 = vld [vmem:[%s266 + $0x210] sm:$0xff]
        %v382 = vld [vmem:[%s266 + $0x218] sm:$0xff]
        %v383 = vld [vmem:[%s266 + $0x220] sm:$0xff]
        %v384 = vld [vmem:[%s266 + $0x228] sm:$0xff]
        %v385 = vld [vmem:[%s266 + $0x230] sm:$0xff]
        %v386 = vld [vmem:[%s266 + $0x238] sm:$0xff]
        %v387 = vld [vmem:[%s266 + $0x240] sm:$0xff]
        %v388 = vld [vmem:[%s266 + $0x248] sm:$0xff]
        %v389 = vld [vmem:[%s266 + $0x250] sm:$0xff]
        %v390 = vld [vmem:[%s266 + $0x258] sm:$0xff]
        %v391 = vld [vmem:[%s266 + $0x260] sm:$0xff]
        %v392 = vld [vmem:[%s266 + $0x268] sm:$0xff]
        %v393 = vld [vmem:[%s266 + $0x270] sm:$0xff]
        %v394 = vld [vmem:[%s266 + $0x278] sm:$0xff]
        %v395 = vld [vmem:[%s266 + $0x280] sm:$0xff]
        %v396 = vld [vmem:[%s266 + $0x288] sm:$0xff]
        %v397 = vld [vmem:[%s266 + $0x290] sm:$0xff]
        %v398 = vld [vmem:[%s266 + $0x298] sm:$0xff]
        %v399 = vld [vmem:[%s266 + $0x2a0] sm:$0xff]
        %v400 = vld [vmem:[%s266 + $0x2a8] sm:$0xff]
        %v401 = vld [vmem:[%s266 + $0x2b0] sm:$0xff]
        %v402 = vld [vmem:[%s266 + $0x2b8] sm:$0xff]
        %v403 = vld [vmem:[%s266 + $0x2c0] sm:$0xff]
        %v404 = vld [vmem:[%s266 + $0x2c8] sm:$0xff]
        %v405 = vld [vmem:[%s266 + $0x2d0] sm:$0xff]
        %v406 = vld [vmem:[%s266 + $0x2d8] sm:$0xff]
        %v407 = vld [vmem:[%s266 + $0x2e0] sm:$0xff]
        %v408 = vld [vmem:[%s266 + $0x2e8] sm:$0xff]
        %v409 = vld [vmem:[%s266 + $0x2f0] sm:$0xff]
        %v410 = vld [vmem:[%s266 + $0x2f8] sm:$0xff]
        %v411 = vld [vmem:[%s266 + $0x300] sm:$0xff]
        %v412 = vld [vmem:[%s266 + $0x308] sm:$0xff]
        %v413 = vld [vmem:[%s266 + $0x310] sm:$0xff]
        %v414 = vld [vmem:[%s266 + $0x318] sm:$0xff]
        %v415 = vld [vmem:[%s266 + $0x320] sm:$0xff]
        %v416 = vld [vmem:[%s266 + $0x328] sm:$0xff]
        %v417 = vld [vmem:[%s266 + $0x330] sm:$0xff]
        %v418 = vld [vmem:[%s266 + $0x338] sm:$0xff]
        %v419 = vld [vmem:[%s266 + $0x340] sm:$0xff]
        %v420 = vld [vmem:[%s266 + $0x348] sm:$0xff]
        %v421 = vld [vmem:[%s266 + $0x350] sm:$0xff]
        %v422 = vld [vmem:[%s266 + $0x358] sm:$0xff]
        %v423 = vld [vmem:[%s266 + $0x360] sm:$0xff]
        %v424 = vld [vmem:[%s266 + $0x368] sm:$0xff]
        %v425 = vld [vmem:[%s266 + $0x370] sm:$0xff]
        %v426 = vld [vmem:[%s266 + $0x378] sm:$0xff]
        %v427 = vld [vmem:[%s266 + $0x380] sm:$0xff]
        %v428 = vld [vmem:[%s266 + $0x388] sm:$0xff]
        %v429 = vld [vmem:[%s266 + $0x390] sm:$0xff]
        %v430 = vld [vmem:[%s266 + $0x398] sm:$0xff]
        %v431 = vld [vmem:[%s266 + $0x3a0] sm:$0xff]
        %v432 = vld [vmem:[%s266 + $0x3a8] sm:$0xff]
        %v433 = vld [vmem:[%s266 + $0x3b0] sm:$0xff]
        %v434 = vld [vmem:[%s266 + $0x3b8] sm:$0xff]
        %v435 = vld [vmem:[%s266 + $0x3c0] sm:$0xff]
        %v436 = vld [vmem:[%s266 + $0x3c8] sm:$0xff]
        %v437 = vld [vmem:[%s266 + $0x3d0] sm:$0xff]
        %v438 = vld [vmem:[%s266 + $0x3d8] sm:$0xff]
        %v439 = vld [vmem:[%s266 + $0x3e0] sm:$0xff]
        %v440 = vld [vmem:[%s266 + $0x3e8] sm:$0xff]
        %v441 = vld [vmem:[%s266 + $0x3f0] sm:$0xff]
        %v442 = vld [vmem:[%s266 + $0x3f8] sm:$0xff]
        %v443 = vunpack.c.l.s8.bf16 %v315
        %v444 = vunpack.c.l.s8.bf16 %v316
        %v445 = vunpack.c.l.s8.bf16 %v317
        %v446 = vunpack.c.l.s8.bf16 %v318
        %v447 = vunpack.c.h.s8.bf16 %v315
        %v448 = vunpack.c.h.s8.bf16 %v316
        %v449 = vunpack.c.h.s8.bf16 %v317
        %v450 = vunpack.c.h.s8.bf16 %v318
        %v451 = vunpack.c.l.s8.bf16 %v319
        %v452 = vunpack.c.l.s8.bf16 %v320
        %v453 = vunpack.c.l.s8.bf16 %v321
        %v454 = vunpack.c.l.s8.bf16 %v322
        %v455 = vunpack.c.h.s8.bf16 %v319
        %v456 = vunpack.c.h.s8.bf16 %v320
        %v457 = vunpack.c.h.s8.bf16 %v321
        %v458 = vunpack.c.h.s8.bf16 %v322
        %v459 = vunpack.c.l.s8.bf16 %v323
        %v460 = vunpack.c.l.s8.bf16 %v324
        %v461 = vunpack.c.l.s8.bf16 %v325
        %v462 = vunpack.c.l.s8.bf16 %v326
        %v463 = vunpack.c.h.s8.bf16 %v323
        %v464 = vunpack.c.h.s8.bf16 %v324
        %v465 = vunpack.c.h.s8.bf16 %v325
        %v466 = vunpack.c.h.s8.bf16 %v326
        %v467 = vunpack.c.l.s8.bf16 %v327
        %v468 = vunpack.c.l.s8.bf16 %v328
        %v469 = vunpack.c.l.s8.bf16 %v329
        %v470 = vunpack.c.l.s8.bf16 %v330
        %v471 = vunpack.c.h.s8.bf16 %v327
        %v472 = vunpack.c.h.s8.bf16 %v328
        %v473 = vunpack.c.h.s8.bf16 %v329
        %v474 = vunpack.c.h.s8.bf16 %v330
        %v475 = vunpack.c.l.s8.bf16 %v331
        %v476 = vunpack.c.l.s8.bf16 %v332
        %v477 = vunpack.c.l.s8.bf16 %v333
        %v478 = vunpack.c.l.s8.bf16 %v334
        %v479 = vunpack.c.h.s8.bf16 %v331
        %v480 = vunpack.c.h.s8.bf16 %v332
        %v481 = vunpack.c.h.s8.bf16 %v333
        %v482 = vunpack.c.h.s8.bf16 %v334
        %v483 = vunpack.c.l.s8.bf16 %v335
        %v484 = vunpack.c.l.s8.bf16 %v336
        %v485 = vunpack.c.l.s8.bf16 %v337
        %v486 = vunpack.c.l.s8.bf16 %v338
        %v487 = vunpack.c.h.s8.bf16 %v335
        %v488 = vunpack.c.h.s8.bf16 %v336
        %v489 = vunpack.c.h.s8.bf16 %v337
        %v490 = vunpack.c.h.s8.bf16 %v338
        %v491 = vunpack.c.l.s8.bf16 %v339
        %v492 = vunpack.c.l.s8.bf16 %v340
        %v493 = vunpack.c.l.s8.bf16 %v341
        %v494 = vunpack.c.l.s8.bf16 %v342
        %v495 = vunpack.c.h.s8.bf16 %v339
        %v496 = vunpack.c.h.s8.bf16 %v340
        %v497 = vunpack.c.h.s8.bf16 %v341
        %v498 = vunpack.c.h.s8.bf16 %v342
        %v499 = vunpack.c.l.s8.bf16 %v343
        %v500 = vunpack.c.l.s8.bf16 %v344
        %v501 = vunpack.c.l.s8.bf16 %v345
        %v502 = vunpack.c.l.s8.bf16 %v346
        %v503 = vunpack.c.h.s8.bf16 %v343
        %v504 = vunpack.c.h.s8.bf16 %v344
        %v505 = vunpack.c.h.s8.bf16 %v345
        %v506 = vunpack.c.h.s8.bf16 %v346
        %v507 = vunpack.c.l.s8.bf16 %v347
        %v508 = vunpack.c.l.s8.bf16 %v348
        %v509 = vunpack.c.l.s8.bf16 %v349
        %v510 = vunpack.c.l.s8.bf16 %v350
        %v511 = vunpack.c.h.s8.bf16 %v347
        %v512 = vunpack.c.h.s8.bf16 %v348
        %v513 = vunpack.c.h.s8.bf16 %v349
        %v514 = vunpack.c.h.s8.bf16 %v350
        %v515 = vunpack.c.l.s8.bf16 %v351
        %v516 = vunpack.c.l.s8.bf16 %v352
        %v517 = vunpack.c.l.s8.bf16 %v353
        %v518 = vunpack.c.l.s8.bf16 %v354
        %v519 = vunpack.c.h.s8.bf16 %v351
        %v520 = vunpack.c.h.s8.bf16 %v352
        %v521 = vunpack.c.h.s8.bf16 %v353
        %v522 = vunpack.c.h.s8.bf16 %v354
        %v523 = vunpack.c.l.s8.bf16 %v355
        %v524 = vunpack.c.l.s8.bf16 %v356
        %v525 = vunpack.c.l.s8.bf16 %v357
        %v526 = vunpack.c.l.s8.bf16 %v358
        %v527 = vunpack.c.h.s8.bf16 %v355
        %v528 = vunpack.c.h.s8.bf16 %v356
        %v529 = vunpack.c.h.s8.bf16 %v357
        %v530 = vunpack.c.h.s8.bf16 %v358
        %v531 = vunpack.c.l.s8.bf16 %v359
        %v532 = vunpack.c.l.s8.bf16 %v360
        %v533 = vunpack.c.l.s8.bf16 %v361
        %v534 = vunpack.c.l.s8.bf16 %v362
        %v535 = vunpack.c.h.s8.bf16 %v359
        %v536 = vunpack.c.h.s8.bf16 %v360
        %v537 = vunpack.c.h.s8.bf16 %v361
        %v538 = vunpack.c.h.s8.bf16 %v362
        %v539 = vunpack.c.l.s8.bf16 %v363
        %v540 = vunpack.c.l.s8.bf16 %v364
        %v541 = vunpack.c.l.s8.bf16 %v365
        %v542 = vunpack.c.l.s8.bf16 %v366
        %v543 = vunpack.c.h.s8.bf16 %v363
        %v544 = vunpack.c.h.s8.bf16 %v364
        %v545 = vunpack.c.h.s8.bf16 %v365
        %v546 = vunpack.c.h.s8.bf16 %v366
        %v547 = vunpack.c.l.s8.bf16 %v367
        %v548 = vunpack.c.l.s8.bf16 %v368
        %v549 = vunpack.c.l.s8.bf16 %v369
        %v550 = vunpack.c.l.s8.bf16 %v370
        %v551 = vunpack.c.h.s8.bf16 %v367
        %v552 = vunpack.c.h.s8.bf16 %v368
        %v553 = vunpack.c.h.s8.bf16 %v369
        %v554 = vunpack.c.h.s8.bf16 %v370
        %v555 = vunpack.c.l.s8.bf16 %v371
        %v556 = vunpack.c.l.s8.bf16 %v372
        %v557 = vunpack.c.l.s8.bf16 %v373
        %v558 = vunpack.c.l.s8.bf16 %v374
        %v559 = vunpack.c.h.s8.bf16 %v371
        %v560 = vunpack.c.h.s8.bf16 %v372
        %v561 = vunpack.c.h.s8.bf16 %v373
        %v562 = vunpack.c.h.s8.bf16 %v374
        %v563 = vunpack.c.l.s8.bf16 %v375
        %v564 = vunpack.c.l.s8.bf16 %v376
        %v565 = vunpack.c.l.s8.bf16 %v377
        %v566 = vunpack.c.l.s8.bf16 %v378
        %v567 = vunpack.c.h.s8.bf16 %v375
        %v568 = vunpack.c.h.s8.bf16 %v376
        %v569 = vunpack.c.h.s8.bf16 %v377
        %v570 = vunpack.c.h.s8.bf16 %v378
        %v571 = vunpack.c.l.s8.bf16 %v379
        %v572 = vunpack.c.l.s8.bf16 %v380
        %v573 = vunpack.c.l.s8.bf16 %v381
        %v574 = vunpack.c.l.s8.bf16 %v382
        %v575 = vunpack.c.h.s8.bf16 %v379
        %v576 = vunpack.c.h.s8.bf16 %v380
        %v577 = vunpack.c.h.s8.bf16 %v381
        %v578 = vunpack.c.h.s8.bf16 %v382
        %v579 = vunpack.c.l.s8.bf16 %v383
        %v580 = vunpack.c.l.s8.bf16 %v384
        %v581 = vunpack.c.l.s8.bf16 %v385
        %v582 = vunpack.c.l.s8.bf16 %v386
        %v583 = vunpack.c.h.s8.bf16 %v383
        %v584 = vunpack.c.h.s8.bf16 %v384
        %v585 = vunpack.c.h.s8.bf16 %v385
        %v586 = vunpack.c.h.s8.bf16 %v386
        %v587 = vunpack.c.l.s8.bf16 %v387
        %v588 = vunpack.c.l.s8.bf16 %v388
        %v589 = vunpack.c.l.s8.bf16 %v389
        %v590 = vunpack.c.l.s8.bf16 %v390
        %v591 = vunpack.c.h.s8.bf16 %v387
        %v592 = vunpack.c.h.s8.bf16 %v388
        %v593 = vunpack.c.h.s8.bf16 %v389
        %v594 = vunpack.c.h.s8.bf16 %v390
        %v595 = vunpack.c.l.s8.bf16 %v391
        %v596 = vunpack.c.l.s8.bf16 %v392
        %v597 = vunpack.c.l.s8.bf16 %v393
        %v598 = vunpack.c.l.s8.bf16 %v394
        %v599 = vunpack.c.h.s8.bf16 %v391
        %v600 = vunpack.c.h.s8.bf16 %v392
        %v601 = vunpack.c.h.s8.bf16 %v393
        %v602 = vunpack.c.h.s8.bf16 %v394
        %v603 = vunpack.c.l.s8.bf16 %v395
        %v604 = vunpack.c.l.s8.bf16 %v396
        %v605 = vunpack.c.l.s8.bf16 %v397
        %v606 = vunpack.c.l.s8.bf16 %v398
        %v607 = vunpack.c.h.s8.bf16 %v395
        %v608 = vunpack.c.h.s8.bf16 %v396
        %v609 = vunpack.c.h.s8.bf16 %v397
        %v610 = vunpack.c.h.s8.bf16 %v398
        %v611 = vunpack.c.l.s8.bf16 %v399
        %v612 = vunpack.c.l.s8.bf16 %v400
        %v613 = vunpack.c.l.s8.bf16 %v401
        %v614 = vunpack.c.l.s8.bf16 %v402
        %v615 = vunpack.c.h.s8.bf16 %v399
        %v616 = vunpack.c.h.s8.bf16 %v400
        %v617 = vunpack.c.h.s8.bf16 %v401
        %v618 = vunpack.c.h.s8.bf16 %v402
        %v619 = vunpack.c.l.s8.bf16 %v403
        %v620 = vunpack.c.l.s8.bf16 %v404
        %v621 = vunpack.c.l.s8.bf16 %v405
        %v622 = vunpack.c.l.s8.bf16 %v406
        %v623 = vunpack.c.h.s8.bf16 %v403
        %v624 = vunpack.c.h.s8.bf16 %v404
        %v625 = vunpack.c.h.s8.bf16 %v405
        %v626 = vunpack.c.h.s8.bf16 %v406
        %v627 = vunpack.c.l.s8.bf16 %v407
        %v628 = vunpack.c.l.s8.bf16 %v408
        %v629 = vunpack.c.l.s8.bf16 %v409
        %v630 = vunpack.c.l.s8.bf16 %v410
        %v631 = vunpack.c.h.s8.bf16 %v407
        %v632 = vunpack.c.h.s8.bf16 %v408
        %v633 = vunpack.c.h.s8.bf16 %v409
        %v634 = vunpack.c.h.s8.bf16 %v410
        %v635 = vunpack.c.l.s8.bf16 %v411
        %v636 = vunpack.c.l.s8.bf16 %v412
        %v637 = vunpack.c.l.s8.bf16 %v413
        %v638 = vunpack.c.l.s8.bf16 %v414
        %v639 = vunpack.c.h.s8.bf16 %v411
        %v640 = vunpack.c.h.s8.bf16 %v412
        %v641 = vunpack.c.h.s8.bf16 %v413
        %v642 = vunpack.c.h.s8.bf16 %v414
        %v643 = vunpack.c.l.s8.bf16 %v415
        %v644 = vunpack.c.l.s8.bf16 %v416
        %v645 = vunpack.c.l.s8.bf16 %v417
        %v646 = vunpack.c.l.s8.bf16 %v418
        %v647 = vunpack.c.h.s8.bf16 %v415
        %v648 = vunpack.c.h.s8.bf16 %v416
        %v649 = vunpack.c.h.s8.bf16 %v417
        %v650 = vunpack.c.h.s8.bf16 %v418
        %v651 = vunpack.c.l.s8.bf16 %v419
        %v652 = vunpack.c.l.s8.bf16 %v420
        %v653 = vunpack.c.l.s8.bf16 %v421
        %v654 = vunpack.c.l.s8.bf16 %v422
        %v655 = vunpack.c.h.s8.bf16 %v419
        %v656 = vunpack.c.h.s8.bf16 %v420
        %v657 = vunpack.c.h.s8.bf16 %v421
        %v658 = vunpack.c.h.s8.bf16 %v422
        %v659 = vunpack.c.l.s8.bf16 %v423
        %v660 = vunpack.c.l.s8.bf16 %v424
        %v661 = vunpack.c.l.s8.bf16 %v425
        %v662 = vunpack.c.l.s8.bf16 %v426
        %v663 = vunpack.c.h.s8.bf16 %v423
        %v664 = vunpack.c.h.s8.bf16 %v424
        %v665 = vunpack.c.h.s8.bf16 %v425
        %v666 = vunpack.c.h.s8.bf16 %v426
        %v667 = vunpack.c.l.s8.bf16 %v427
        %v668 = vunpack.c.l.s8.bf16 %v428
        %v669 = vunpack.c.l.s8.bf16 %v429
        %v670 = vunpack.c.l.s8.bf16 %v430
        %v671 = vunpack.c.h.s8.bf16 %v427
        %v672 = vunpack.c.h.s8.bf16 %v428
        %v673 = vunpack.c.h.s8.bf16 %v429
        %v674 = vunpack.c.h.s8.bf16 %v430
        %v675 = vunpack.c.l.s8.bf16 %v431
        %v676 = vunpack.c.l.s8.bf16 %v432
        %v677 = vunpack.c.l.s8.bf16 %v433
        %v678 = vunpack.c.l.s8.bf16 %v434
        %v679 = vunpack.c.h.s8.bf16 %v431
        %v680 = vunpack.c.h.s8.bf16 %v432
        %v681 = vunpack.c.h.s8.bf16 %v433
        %v682 = vunpack.c.h.s8.bf16 %v434
        %v683 = vunpack.c.l.s8.bf16 %v435
        %v684 = vunpack.c.l.s8.bf16 %v436
        %v685 = vunpack.c.l.s8.bf16 %v437
        %v686 = vunpack.c.l.s8.bf16 %v438
        %v687 = vunpack.c.h.s8.bf16 %v435
        %v688 = vunpack.c.h.s8.bf16 %v436
        %v689 = vunpack.c.h.s8.bf16 %v437
        %v690 = vunpack.c.h.s8.bf16 %v438
        %v691 = vunpack.c.l.s8.bf16 %v439
        %v692 = vunpack.c.l.s8.bf16 %v440
        %v693 = vunpack.c.l.s8.bf16 %v441
        %v694 = vunpack.c.l.s8.bf16 %v442
        %v695 = vunpack.c.h.s8.bf16 %v439
        %v696 = vunpack.c.h.s8.bf16 %v440
        %v697 = vunpack.c.h.s8.bf16 %v441
        %v698 = vunpack.c.h.s8.bf16 %v442
        %v707 = vunpack.c.l.b16 %v307
        %v708 = vunpack.c.h.b16 %v307
        %v709 = vunpack.c.l.b16 %v308
        %v710 = vunpack.c.h.b16 %v308
        %v711 = vunpack.c.l.b16 %v309
        %v712 = vunpack.c.h.b16 %v309
        %v713 = vunpack.c.l.b16 %v310
        %v714 = vunpack.c.h.b16 %v310
        %v715 = vunpack.c.l.b16 %v311
        %v716 = vunpack.c.h.b16 %v311
        %v717 = vunpack.c.l.b16 %v312
        %v718 = vunpack.c.h.b16 %v312
        %v719 = vunpack.c.l.b16 %v313
        %v720 = vunpack.c.h.b16 %v313
        %v721 = vunpack.c.l.b16 %v314
        %v722 = vunpack.c.h.b16 %v314
        %v723 = vpack.c.b16 %v715, %v707
        %v724 = vpack.c.b16 %v716, %v708
        %v725 = vpack.c.b16 %v717, %v709
        %v726 = vpack.c.b16 %v718, %v710
        %v727 = vpack.c.b16 %v719, %v711
        %v728 = vpack.c.b16 %v720, %v712
        %v729 = vpack.c.b16 %v721, %v713
        %v730 = vpack.c.b16 %v722, %v714
        %739 = vmatprep.subr.bf16.mxu0 %v444
        %740 = vmatpush1.bf16.msra.mxu0 %v443
        %741 = vmatprep.subr.bf16.mxu0 %v448
        %742 = vmatpush1.bf16.msra.mxu0 %v447
        %743 = vmatprep.subr.bf16.mxu0 %v452
        %744 = vmatpush1.bf16.msra.mxu0 %v451
        %745 = vmatprep.subr.bf16.mxu0 %v456
        %746 = vmatpush1.bf16.msra.mxu0 %v455
        %747 = vmatprep.subr.bf16.mxu0 %v460
        %748 = vmatpush1.bf16.msra.mxu0 %v459
        %749 = vmatprep.subr.bf16.mxu0 %v464
        %750 = vmatpush1.bf16.msra.mxu0 %v463
        %751 = vmatprep.subr.bf16.mxu0 %v468
        %752 = vmatpush1.bf16.msra.mxu0 %v467
        %753 = vmatprep.subr.bf16.mxu0 %v472
        %754 = vmatpush1.bf16.msra.mxu0 %v471
        %755 = vmatprep.subr.bf16.mxu0 %v476
        %756 = vmatpush1.bf16.msra.mxu0 %v475
        %757 = vmatprep.subr.bf16.mxu0 %v480
        %758 = vmatpush1.bf16.msra.mxu0 %v479
        %759 = vmatprep.subr.bf16.mxu0 %v484
        %760 = vmatpush1.bf16.msra.mxu0 %v483
        %761 = vmatprep.subr.bf16.mxu0 %v488
        %762 = vmatpush1.bf16.msra.mxu0 %v487
        %763 = vmatprep.subr.bf16.mxu0 %v492
        %764 = vmatpush1.bf16.msra.mxu0 %v491
        %765 = vmatprep.subr.bf16.mxu0 %v496
        %766 = vmatpush1.bf16.msra.mxu0 %v495
        %767 = vmatprep.subr.bf16.mxu0 %v500
        %768 = vmatpush1.bf16.msra.mxu0 %v499
        %769 = vmatprep.subr.bf16.mxu0 %v504
        %770 = vmatpush1.bf16.msra.mxu0 %v503
        %771 = vmatprep.mubr.bf16.mxu0 %v724
        %772 = vmatmul.mubr.bf16.gmra.mrb[0].mxu0 %v723
        %v773 = vpop.f32.mrb[0].mxu0
        %v774 = vadd.f32 0.0, %v773
        %v775 = vpop.f32.mrb[0].mxu0
        %v776 = vadd.f32 0.0, %v775
        %v777 = vpop.f32.mrb[0].mxu0
        %v778 = vadd.f32 0.0, %v777
        %v779 = vpop.f32.mrb[0].mxu0
        %v780 = vadd.f32 0.0, %v779
        %781 = vdwg.mxu0
        %782 = vmatprep.subr.bf16.mxu0 %v508
        %783 = vmatpush1.bf16.msra.mxu0 %v507
        %784 = vmatprep.subr.bf16.mxu0 %v512
        %785 = vmatpush1.bf16.msra.mxu0 %v511
        %786 = vmatprep.subr.bf16.mxu0 %v516
        %787 = vmatpush1.bf16.msra.mxu0 %v515
        %788 = vmatprep.subr.bf16.mxu0 %v520
        %789 = vmatpush1.bf16.msra.mxu0 %v519
        %790 = vmatprep.subr.bf16.mxu0 %v524
        %791 = vmatpush1.bf16.msra.mxu0 %v523
        %792 = vmatprep.subr.bf16.mxu0 %v528
        %793 = vmatpush1.bf16.msra.mxu0 %v527
        %794 = vmatprep.subr.bf16.mxu0 %v532
        %795 = vmatpush1.bf16.msra.mxu0 %v531
        %796 = vmatprep.subr.bf16.mxu0 %v536
        %797 = vmatpush1.bf16.msra.mxu0 %v535
        %798 = vmatprep.subr.bf16.mxu0 %v540
        %799 = vmatpush1.bf16.msra.mxu0 %v539
        %800 = vmatprep.subr.bf16.mxu0 %v544
        %801 = vmatpush1.bf16.msra.mxu0 %v543
        %802 = vmatprep.subr.bf16.mxu0 %v548
        %803 = vmatpush1.bf16.msra.mxu0 %v547
        %804 = vmatprep.subr.bf16.mxu0 %v552
        %805 = vmatpush1.bf16.msra.mxu0 %v551
        %806 = vmatprep.subr.bf16.mxu0 %v556
        %807 = vmatpush1.bf16.msra.mxu0 %v555
        %808 = vmatprep.subr.bf16.mxu0 %v560
        %809 = vmatpush1.bf16.msra.mxu0 %v559
        %810 = vmatprep.subr.bf16.mxu0 %v564
        %811 = vmatpush1.bf16.msra.mxu0 %v563
        %812 = vmatprep.subr.bf16.mxu0 %v568
        %813 = vmatpush1.bf16.msra.mxu0 %v567
        %814 = vmatprep.mubr.bf16.mxu0 %v726
        %815 = vmatmul.mubr.bf16.gmra.mrb[0].mxu0 %v725
        %v816 = vpop.f32.mrb[0].mxu0
        %v817 = vadd.f32 %v774, %v816
        %v818 = vpop.f32.mrb[0].mxu0
        %v819 = vadd.f32 %v776, %v818
        %v820 = vpop.f32.mrb[0].mxu0
        %v821 = vadd.f32 %v778, %v820
        %v822 = vpop.f32.mrb[0].mxu0
        %v823 = vadd.f32 %v780, %v822
        %824 = vdwg.mxu0
        %825 = vmatprep.subr.bf16.mxu0 %v572
        %826 = vmatpush1.bf16.msra.mxu0 %v571
        %827 = vmatprep.subr.bf16.mxu0 %v576
        %828 = vmatpush1.bf16.msra.mxu0 %v575
        %829 = vmatprep.subr.bf16.mxu0 %v580
        %830 = vmatpush1.bf16.msra.mxu0 %v579
        %831 = vmatprep.subr.bf16.mxu0 %v584
        %832 = vmatpush1.bf16.msra.mxu0 %v583
        %833 = vmatprep.subr.bf16.mxu0 %v588
        %834 = vmatpush1.bf16.msra.mxu0 %v587
        %835 = vmatprep.subr.bf16.mxu0 %v592
        %836 = vmatpush1.bf16.msra.mxu0 %v591
        %837 = vmatprep.subr.bf16.mxu0 %v596
        %838 = vmatpush1.bf16.msra.mxu0 %v595
        %839 = vmatprep.subr.bf16.mxu0 %v600
        %840 = vmatpush1.bf16.msra.mxu0 %v599
        %841 = vmatprep.subr.bf16.mxu0 %v604
        %842 = vmatpush1.bf16.msra.mxu0 %v603
        %843 = vmatprep.subr.bf16.mxu0 %v608
        %844 = vmatpush1.bf16.msra.mxu0 %v607
        %845 = vmatprep.subr.bf16.mxu0 %v612
        %846 = vmatpush1.bf16.msra.mxu0 %v611
        %847 = vmatprep.subr.bf16.mxu0 %v616
        %848 = vmatpush1.bf16.msra.mxu0 %v615
        %849 = vmatprep.subr.bf16.mxu0 %v620
        %850 = vmatpush1.bf16.msra.mxu0 %v619
        %851 = vmatprep.subr.bf16.mxu0 %v624
        %852 = vmatpush1.bf16.msra.mxu0 %v623
        %853 = vmatprep.subr.bf16.mxu0 %v628
        %854 = vmatpush1.bf16.msra.mxu0 %v627
        %855 = vmatprep.subr.bf16.mxu0 %v632
        %856 = vmatpush1.bf16.msra.mxu0 %v631
        %857 = vmatprep.mubr.bf16.mxu0 %v728
        %858 = vmatmul.mubr.bf16.gmra.mrb[0].mxu0 %v727
        %v859 = vpop.f32.mrb[0].mxu0
        %v860 = vadd.f32 %v817, %v859
        %v861 = vpop.f32.mrb[0].mxu0
        %v862 = vadd.f32 %v819, %v861
        %v863 = vpop.f32.mrb[0].mxu0
        %v864 = vadd.f32 %v821, %v863
        %v865 = vpop.f32.mrb[0].mxu0
        %v866 = vadd.f32 %v823, %v865
        %867 = vdwg.mxu0
        %868 = vmatprep.subr.bf16.mxu0 %v636
        %869 = vmatpush1.bf16.msra.mxu0 %v635
        %870 = vmatprep.subr.bf16.mxu0 %v640
        %871 = vmatpush1.bf16.msra.mxu0 %v639
        %872 = vmatprep.subr.bf16.mxu0 %v644
        %873 = vmatpush1.bf16.msra.mxu0 %v643
        %874 = vmatprep.subr.bf16.mxu0 %v648
        %875 = vmatpush1.bf16.msra.mxu0 %v647
        %876 = vmatprep.subr.bf16.mxu0 %v652
        %877 = vmatpush1.bf16.msra.mxu0 %v651
        %878 = vmatprep.subr.bf16.mxu0 %v656
        %879 = vmatpush1.bf16.msra.mxu0 %v655
        %880 = vmatprep.subr.bf16.mxu0 %v660
        %881 = vmatpush1.bf16.msra.mxu0 %v659
        %882 = vmatprep.subr.bf16.mxu0 %v664
        %883 = vmatpush1.bf16.msra.mxu0 %v663
        %884 = vmatprep.subr.bf16.mxu0 %v668
        %885 = vmatpush1.bf16.msra.mxu0 %v667
        %886 = vmatprep.subr.bf16.mxu0 %v672
        %887 = vmatpush1.bf16.msra.mxu0 %v671
        %888 = vmatprep.subr.bf16.mxu0 %v676
        %889 = vmatpush1.bf16.msra.mxu0 %v675
        %890 = vmatprep.subr.bf16.mxu0 %v680
        %891 = vmatpush1.bf16.msra.mxu0 %v679
        %892 = vmatprep.subr.bf16.mxu0 %v684
        %893 = vmatpush1.bf16.msra.mxu0 %v683
        %894 = vmatprep.subr.bf16.mxu0 %v688
        %895 = vmatpush1.bf16.msra.mxu0 %v687
        %896 = vmatprep.subr.bf16.mxu0 %v692
        %897 = vmatpush1.bf16.msra.mxu0 %v691
        %898 = vmatprep.subr.bf16.mxu0 %v696
        %899 = vmatpush1.bf16.msra.mxu0 %v695
        %900 = vmatprep.mubr.bf16.mxu0 %v730
        %901 = vmatmul.mubr.bf16.gmra.mrb[0].mxu0 %v729
        %v902 = vpop.f32.mrb[0].mxu0
        %v903 = vadd.f32 %v860, %v902
        %v904 = vpop.f32.mrb[0].mxu0
        %v905 = vadd.f32 %v862, %v904
        %v906 = vpop.f32.mrb[0].mxu0
        %v907 = vadd.f32 %v864, %v906
        %v908 = vpop.f32.mrb[0].mxu0
        %v909 = vadd.f32 %v866, %v908
        %910 = vdwg.mxu0
        %911 = vmatprep.subr.bf16.mxu0 %v446
        %912 = vmatpush1.bf16.msra.mxu0 %v445
        %913 = vmatprep.subr.bf16.mxu0 %v450
        %914 = vmatpush1.bf16.msra.mxu0 %v449
        %915 = vmatprep.subr.bf16.mxu0 %v454
        %916 = vmatpush1.bf16.msra.mxu0 %v453
        %917 = vmatprep.subr.bf16.mxu0 %v458
        %918 = vmatpush1.bf16.msra.mxu0 %v457
        %919 = vmatprep.subr.bf16.mxu0 %v462
        %920 = vmatpush1.bf16.msra.mxu0 %v461
        %921 = vmatprep.subr.bf16.mxu0 %v466
        %922 = vmatpush1.bf16.msra.mxu0 %v465
        %923 = vmatprep.subr.bf16.mxu0 %v470
        %924 = vmatpush1.bf16.msra.mxu0 %v469
        %925 = vmatprep.subr.bf16.mxu0 %v474
        %926 = vmatpush1.bf16.msra.mxu0 %v473
        %927 = vmatprep.subr.bf16.mxu0 %v478
        %928 = vmatpush1.bf16.msra.mxu0 %v477
        %929 = vmatprep.subr.bf16.mxu0 %v482
        %930 = vmatpush1.bf16.msra.mxu0 %v481
        %931 = vmatprep.subr.bf16.mxu0 %v486
        %932 = vmatpush1.bf16.msra.mxu0 %v485
        %933 = vmatprep.subr.bf16.mxu0 %v490
        %934 = vmatpush1.bf16.msra.mxu0 %v489
        %935 = vmatprep.subr.bf16.mxu0 %v494
        %936 = vmatpush1.bf16.msra.mxu0 %v493
        %937 = vmatprep.subr.bf16.mxu0 %v498
        %938 = vmatpush1.bf16.msra.mxu0 %v497
        %939 = vmatprep.subr.bf16.mxu0 %v502
        %940 = vmatpush1.bf16.msra.mxu0 %v501
        %941 = vmatprep.subr.bf16.mxu0 %v506
        %942 = vmatpush1.bf16.msra.mxu0 %v505
        %943 = vmatprep.mubr.bf16.mxu0 %v724
        %944 = vmatmul.mubr.bf16.gmra.mrb[0].mxu0 %v723
        %v945 = vpop.f32.mrb[0].mxu0
        %v946 = vadd.f32 0.0, %v945
        %v947 = vpop.f32.mrb[0].mxu0
        %v948 = vadd.f32 0.0, %v947
        %v949 = vpop.f32.mrb[0].mxu0
        %v950 = vadd.f32 0.0, %v949
        %v951 = vpop.f32.mrb[0].mxu0
        %v952 = vadd.f32 0.0, %v951
        %953 = vdwg.mxu0
        %954 = vmatprep.subr.bf16.mxu0 %v510
        %955 = vmatpush1.bf16.msra.mxu0 %v509
        %956 = vmatprep.subr.bf16.mxu0 %v514
        %957 = vmatpush1.bf16.msra.mxu0 %v513
        %958 = vmatprep.subr.bf16.mxu0 %v518
        %959 = vmatpush1.bf16.msra.mxu0 %v517
        %960 = vmatprep.subr.bf16.mxu0 %v522
        %961 = vmatpush1.bf16.msra.mxu0 %v521
        %962 = vmatprep.subr.bf16.mxu0 %v526
        %963 = vmatpush1.bf16.msra.mxu0 %v525
        %964 = vmatprep.subr.bf16.mxu0 %v530
        %965 = vmatpush1.bf16.msra.mxu0 %v529
        %966 = vmatprep.subr.bf16.mxu0 %v534
        %967 = vmatpush1.bf16.msra.mxu0 %v533
        %968 = vmatprep.subr.bf16.mxu0 %v538
        %969 = vmatpush1.bf16.msra.mxu0 %v537
        %970 = vmatprep.subr.bf16.mxu0 %v542
        %971 = vmatpush1.bf16.msra.mxu0 %v541
        %972 = vmatprep.subr.bf16.mxu0 %v546
        %973 = vmatpush1.bf16.msra.mxu0 %v545
        %974 = vmatprep.subr.bf16.mxu0 %v550
        %975 = vmatpush1.bf16.msra.mxu0 %v549
        %976 = vmatprep.subr.bf16.mxu0 %v554
        %977 = vmatpush1.bf16.msra.mxu0 %v553
        %978 = vmatprep.subr.bf16.mxu0 %v558
        %979 = vmatpush1.bf16.msra.mxu0 %v557
        %980 = vmatprep.subr.bf16.mxu0 %v562
        %981 = vmatpush1.bf16.msra.mxu0 %v561
        %982 = vmatprep.subr.bf16.mxu0 %v566
        %983 = vmatpush1.bf16.msra.mxu0 %v565
        %984 = vmatprep.subr.bf16.mxu0 %v570
        %985 = vmatpush1.bf16.msra.mxu0 %v569
        %986 = vmatprep.mubr.bf16.mxu0 %v726
        %987 = vmatmul.mubr.bf16.gmra.mrb[0].mxu0 %v725
        %v988 = vpop.f32.mrb[0].mxu0
        %v989 = vadd.f32 %v946, %v988
        %v990 = vpop.f32.mrb[0].mxu0
        %v991 = vadd.f32 %v948, %v990
        %v992 = vpop.f32.mrb[0].mxu0
        %v993 = vadd.f32 %v950, %v992
        %v994 = vpop.f32.mrb[0].mxu0
        %v995 = vadd.f32 %v952, %v994
        %996 = vdwg.mxu0
        %997 = vmatprep.subr.bf16.mxu0 %v574
        %998 = vmatpush1.bf16.msra.mxu0 %v573
        %999 = vmatprep.subr.bf16.mxu0 %v578
        %1000 = vmatpush1.bf16.msra.mxu0 %v577
        %1001 = vmatprep.subr.bf16.mxu0 %v582
        %1002 = vmatpush1.bf16.msra.mxu0 %v581
        %1003 = vmatprep.subr.bf16.mxu0 %v586
        %1004 = vmatpush1.bf16.msra.mxu0 %v585
        %1005 = vmatprep.subr.bf16.mxu0 %v590
        %1006 = vmatpush1.bf16.msra.mxu0 %v589
        %1007 = vmatprep.subr.bf16.mxu0 %v594
        %1008 = vmatpush1.bf16.msra.mxu0 %v593
        %1009 = vmatprep.subr.bf16.mxu0 %v598
        %1010 = vmatpush1.bf16.msra.mxu0 %v597
        %1011 = vmatprep.subr.bf16.mxu0 %v602
        %1012 = vmatpush1.bf16.msra.mxu0 %v601
        %1013 = vmatprep.subr.bf16.mxu0 %v606
        %1014 = vmatpush1.bf16.msra.mxu0 %v605
        %1015 = vmatprep.subr.bf16.mxu0 %v610
        %1016 = vmatpush1.bf16.msra.mxu0 %v609
        %1017 = vmatprep.subr.bf16.mxu0 %v614
        %1018 = vmatpush1.bf16.msra.mxu0 %v613
        %1019 = vmatprep.subr.bf16.mxu0 %v618
        %1020 = vmatpush1.bf16.msra.mxu0 %v617
        %1021 = vmatprep.subr.bf16.mxu0 %v622
        %1022 = vmatpush1.bf16.msra.mxu0 %v621
        %1023 = vmatprep.subr.bf16.mxu0 %v626
        %1024 = vmatpush1.bf16.msra.mxu0 %v625
        %1025 = vmatprep.subr.bf16.mxu0 %v630
        %1026 = vmatpush1.bf16.msra.mxu0 %v629
        %1027 = vmatprep.subr.bf16.mxu0 %v634
        %1028 = vmatpush1.bf16.msra.mxu0 %v633
        %1029 = vmatprep.mubr.bf16.mxu0 %v728
        %1030 = vmatmul.mubr.bf16.gmra.mrb[0].mxu0 %v727
        %v1031 = vpop.f32.mrb[0].mxu0
        %v1032 = vadd.f32 %v989, %v1031
        %v1033 = vpop.f32.mrb[0].mxu0
        %v1034 = vadd.f32 %v991, %v1033
        %v1035 = vpop.f32.mrb[0].mxu0
        %v1036 = vadd.f32 %v993, %v1035
        %v1037 = vpop.f32.mrb[0].mxu0
        %v1038 = vadd.f32 %v995, %v1037
        %1039 = vdwg.mxu0
        %1040 = vmatprep.subr.bf16.mxu0 %v638
        %1041 = vmatpush1.bf16.msra.mxu0 %v637
        %1042 = vmatprep.subr.bf16.mxu0 %v642
        %1043 = vmatpush1.bf16.msra.mxu0 %v641
        %1044 = vmatprep.subr.bf16.mxu0 %v646
        %1045 = vmatpush1.bf16.msra.mxu0 %v645
        %1046 = vmatprep.subr.bf16.mxu0 %v650
        %1047 = vmatpush1.bf16.msra.mxu0 %v649
        %1048 = vmatprep.subr.bf16.mxu0 %v654
        %1049 = vmatpush1.bf16.msra.mxu0 %v653
        %1050 = vmatprep.subr.bf16.mxu0 %v658
        %1051 = vmatpush1.bf16.msra.mxu0 %v657
        %1052 = vmatprep.subr.bf16.mxu0 %v662
        %1053 = vmatpush1.bf16.msra.mxu0 %v661
        %1054 = vmatprep.subr.bf16.mxu0 %v666
        %1055 = vmatpush1.bf16.msra.mxu0 %v665
        %1056 = vmatprep.subr.bf16.mxu0 %v670
        %1057 = vmatpush1.bf16.msra.mxu0 %v669
        %1058 = vmatprep.subr.bf16.mxu0 %v674
        %1059 = vmatpush1.bf16.msra.mxu0 %v673
        %1060 = vmatprep.subr.bf16.mxu0 %v678
        %1061 = vmatpush1.bf16.msra.mxu0 %v677
        %1062 = vmatprep.subr.bf16.mxu0 %v682
        %1063 = vmatpush1.bf16.msra.mxu0 %v681
        %1064 = vmatprep.subr.bf16.mxu0 %v686
        %1065 = vmatpush1.bf16.msra.mxu0 %v685
        %1066 = vmatprep.subr.bf16.mxu0 %v690
        %1067 = vmatpush1.bf16.msra.mxu0 %v689
        %1068 = vmatprep.subr.bf16.mxu0 %v694
        %1069 = vmatpush1.bf16.msra.mxu0 %v693
        %1070 = vmatprep.subr.bf16.mxu0 %v698
        %1071 = vmatpush1.bf16.msra.mxu0 %v697
        %1072 = vmatprep.mubr.bf16.mxu0 %v730
        %1073 = vmatmul.mubr.bf16.gmra.mrb[0].mxu0 %v729
        %v1074 = vpop.f32.mrb[0].mxu0
        %v1075 = vadd.f32 %v1032, %v1074
        %v1076 = vpop.f32.mrb[0].mxu0
        %v1077 = vadd.f32 %v1034, %v1076
        %v1078 = vpop.f32.mrb[0].mxu0
        %v1079 = vadd.f32 %v1036, %v1078
        %v1080 = vpop.f32.mrb[0].mxu0
        %v1081 = vadd.f32 %v1038, %v1080
        %1082 = vdwg.mxu0
        %v1083 = vld [vmem:[%s303] sm:$0xf]
        %v1085 = vlaneseq
        %v1086 = vshrl.u32 %v1085, 7
        %v1087 = vsub.s32 0, %v1086
        %v1088 = vrot.slane %v1083, %v1087
        %v1089 = vlaneseq
        %v1090 = vshrl.u32 %v1089, 7
        %v1091 = vsub.s32 1, %v1090
        %v1092 = vrot.slane %v1083, %v1091
        %v1093 = vlaneseq
        %v1094 = vshrl.u32 %v1093, 7
        %v1095 = vsub.s32 2, %v1094
        %v1096 = vrot.slane %v1083, %v1095
        %v1097 = vlaneseq
        %v1098 = vshrl.u32 %v1097, 7
        %v1099 = vsub.s32 3, %v1098
        %v1100 = vrot.slane %v1083, %v1099
        %v1105 = vmul.f32 %v903, %v1088
        %v1106 = vmul.f32 %v905, %v1092
        %v1107 = vmul.f32 %v1075, %v1096
        %v1108 = vmul.f32 %v1077, %v1100
        %v1109 = vmul.f32 %v907, %v1088
        %v1110 = vmul.f32 %v909, %v1092
        %v1111 = vmul.f32 %v1079, %v1096
        %v1112 = vmul.f32 %v1081, %v1100
        %v1113 = vld [vmem:[%s3] sm:$0xff]
        %v1114 = vld [vmem:[%s3 + $0x8] sm:$0xff]
        %1116 = vset.pattern.permute.xlu0 0
        %1117 = vperm.xlu0 %1116, %v1113
        %v1118 = vpop.permute.xlu0 %1117
        %1121 = vset.pattern.permute.xlu0 0
        %1122 = vperm.xlu0 %1121, %v1114
        %v1123 = vpop.permute.xlu0 %1122
        %v1125 = vadd.f32 %v1105, %v1118
        %v1126 = vadd.f32 %v1106, %v1118
        %v1127 = vadd.f32 %v1107, %v1118
        %v1128 = vadd.f32 %v1108, %v1118
        %v1129 = vadd.f32 %v1109, %v1123
        %v1130 = vadd.f32 %v1110, %v1123
        %v1131 = vadd.f32 %v1111, %v1123
        %v1132 = vadd.f32 %v1112, %v1123
        %v1133 = vmax.f32 %v1125, 0.0
        %v1134 = vmax.f32 %v1126, 0.0
        %v1135 = vmax.f32 %v1127, 0.0
        %v1136 = vmax.f32 %v1128, 0.0
        %v1137 = vmax.f32 %v1129, 0.0
        %v1138 = vmax.f32 %v1130, 0.0
        %v1139 = vmax.f32 %v1131, 0.0
        %v1140 = vmax.f32 %v1132, 0.0
        %v1141 = vld [vmem:[%s4] sm:$0xf]
        %v1142 = vpack.c.bf16 %v1137, %v1133
        %v1143 = vpack.c.bf16 %v1138, %v1134
        %v1144 = vpack.c.bf16 %v1139, %v1135
        %v1145 = vpack.c.bf16 %v1140, %v1136
        %v1146 = vld [vmem:[%s5] sm:$0xff]
        %1148 = vset.pattern.permute.xlu0 0
        %1149 = vperm.xlu0 %1148, %v1146
        %v1150 = vpop.permute.xlu0 %1149
        %vm1152 = vcmask 130048
        %v1154 = vsel %vm1152, %v1141, 0
        %1156 = vmatprep.subr.bf16.mxu0 %v1143
        %1157 = vmatpush1.bf16.msra.mxu0 %v1142
        %1158 = vmatprep.subr.bf16.mxu0 0
        %1159 = vmatpush1.bf16.msra.mxu0 0
        %1160 = vmatprep.subr.bf16.mxu0 0
        %1161 = vmatpush1.bf16.msra.mxu0 0
        %1162 = vmatprep.subr.bf16.mxu0 0
        %1163 = vmatpush1.bf16.msra.mxu0 0
        %1164 = vmatprep.subr.bf16.mxu0 0
        %1165 = vmatpush1.bf16.msra.mxu0 0
        %1166 = vmatprep.subr.bf16.mxu0 0
        %1167 = vmatpush1.bf16.msra.mxu0 0
        %1168 = vmatprep.subr.bf16.mxu0 0
        %1169 = vmatpush1.bf16.msra.mxu0 0
        %1170 = vmatprep.subr.bf16.mxu0 0
        %1171 = vmatpush1.bf16.msra.mxu0 0
        %1172 = vmatprep.subr.bf16.mxu0 0
        %1173 = vmatpush1.bf16.msra.mxu0 0
        %1174 = vmatprep.subr.bf16.mxu0 0
        %1175 = vmatpush1.bf16.msra.mxu0 0
        %1176 = vmatprep.subr.bf16.mxu0 0
        %1177 = vmatpush1.bf16.msra.mxu0 0
        %1178 = vmatprep.subr.bf16.mxu0 0
        %1179 = vmatpush1.bf16.msra.mxu0 0
        %1180 = vmatprep.subr.bf16.mxu0 0
        %1181 = vmatpush1.bf16.msra.mxu0 0
        %1182 = vmatprep.subr.bf16.mxu0 0
        %1183 = vmatpush1.bf16.msra.mxu0 0
        %1184 = vmatprep.subr.bf16.mxu0 0
        %1185 = vmatpush1.bf16.msra.mxu0 0
        %1186 = vmatprep.subr.bf16.mxu0 0
        %1187 = vmatpush1.bf16.msra.mxu0 0
        %1188 = vmatprep.mubr.bf16.mxu0 0
        %1189 = vmatmul.mubr.bf16.gmra.mrb[0].mxu0 %v1154
        %v1190 = vpop.f32.mrb[0].mxu0
        %v1191 = vadd.f32 %v1150, %v1190
        %v1192 = vpop.f32.mrb[0].mxu0
        %v1193 = vadd.f32 %v1150, %v1192
        %v1194 = vpop.f32.mrb[0].mxu0
        %v1195 = vpop.f32.mrb[0].mxu0
        %1196 = vdwg.mxu0
        %1197 = vmatprep.subr.bf16.mxu0 %v1145
        %1198 = vmatpush1.bf16.msra.mxu0 %v1144
        %1199 = vmatprep.subr.bf16.mxu0 0
        %1200 = vmatpush1.bf16.msra.mxu0 0
        %1201 = vmatprep.subr.bf16.mxu0 0
        %1202 = vmatpush1.bf16.msra.mxu0 0
        %1203 = vmatprep.subr.bf16.mxu0 0
        %1204 = vmatpush1.bf16.msra.mxu0 0
        %1205 = vmatprep.subr.bf16.mxu0 0
        %1206 = vmatpush1.bf16.msra.mxu0 0
        %1207 = vmatprep.subr.bf16.mxu0 0
        %1208 = vmatpush1.bf16.msra.mxu0 0
        %1209 = vmatprep.subr.bf16.mxu0 0
        %1210 = vmatpush1.bf16.msra.mxu0 0
        %1211 = vmatprep.subr.bf16.mxu0 0
        %1212 = vmatpush1.bf16.msra.mxu0 0
        %1213 = vmatprep.subr.bf16.mxu0 0
        %1214 = vmatpush1.bf16.msra.mxu0 0
        %1215 = vmatprep.subr.bf16.mxu0 0
        %1216 = vmatpush1.bf16.msra.mxu0 0
        %1217 = vmatprep.subr.bf16.mxu0 0
        %1218 = vmatpush1.bf16.msra.mxu0 0
        %1219 = vmatprep.subr.bf16.mxu0 0
        %1220 = vmatpush1.bf16.msra.mxu0 0
        %1221 = vmatprep.subr.bf16.mxu0 0
        %1222 = vmatpush1.bf16.msra.mxu0 0
        %1223 = vmatprep.subr.bf16.mxu0 0
        %1224 = vmatpush1.bf16.msra.mxu0 0
        %1225 = vmatprep.subr.bf16.mxu0 0
        %1226 = vmatpush1.bf16.msra.mxu0 0
        %1227 = vmatprep.subr.bf16.mxu0 0
        %1228 = vmatpush1.bf16.msra.mxu0 0
        %1229 = vmatprep.mubr.bf16.mxu0 0
        %1230 = vmatmul.mubr.bf16.gmra.mrb[0].mxu0 %v1154
        %v1231 = vpop.f32.mrb[0].mxu0
        %v1232 = vadd.f32 %v1150, %v1231
        %v1233 = vpop.f32.mrb[0].mxu0
        %v1234 = vadd.f32 %v1150, %v1233
        %v1235 = vpop.f32.mrb[0].mxu0
        %v1236 = vpop.f32.mrb[0].mxu0
        %1237 = vdwg.mxu0
        %v1238 = vlaneseq
        %v1239 = vshrl.u32 %v1238, 7
        %vm1240 = vcmp.lt.s32.totalorder %v1239, 5
        %v1241 = vsel %vm1240, %v1191, -inf
        %v1242 = vsel %vm1240, %v1193, -inf
        %v1243 = vsel %vm1240, %v1232, -inf
        %v1244 = vsel %vm1240, %v1234, -inf
        %v1245 = vrot.slane %v1241, 4
        %v1246 = vmax.f32 %v1241, %v1245
        %v1247 = vrot.slane %v1246, 2
        %v1248 = vmax.f32 %v1246, %v1247
        %v1249 = vrot.slane %v1248, 1
        %v1250 = vmax.f32 %v1248, %v1249
        %v1251 = vrot.slane %v1242, 4
        %v1252 = vmax.f32 %v1242, %v1251
        %v1253 = vrot.slane %v1252, 2
        %v1254 = vmax.f32 %v1252, %v1253
        %v1255 = vrot.slane %v1254, 1
        %v1256 = vmax.f32 %v1254, %v1255
        %v1257 = vrot.slane %v1243, 4
        %v1258 = vmax.f32 %v1243, %v1257
        %v1259 = vrot.slane %v1258, 2
        %v1260 = vmax.f32 %v1258, %v1259
        %v1261 = vrot.slane %v1260, 1
        %v1262 = vmax.f32 %v1260, %v1261
        %v1263 = vrot.slane %v1244, 4
        %v1264 = vmax.f32 %v1244, %v1263
        %v1265 = vrot.slane %v1264, 2
        %v1266 = vmax.f32 %v1264, %v1265
        %v1267 = vrot.slane %v1266, 1
        %v1268 = vmax.f32 %v1266, %v1267
        %v1269 = vsub.f32 %v1241, %v1250
        %v1270 = vsub.f32 %v1242, %v1256
        %v1271 = vsub.f32 %v1243, %v1262
        %v1272 = vsub.f32 %v1244, %v1268
        %v1273 = vmul.f32 %v1269, 1.442695
        %v1274 = vpow.pop %v1273
        %v1275 = vmul.f32 %v1270, 1.442695
        %v1276 = vpow.pop %v1275
        %v1277 = vmul.f32 %v1271, 1.442695
        %v1278 = vpow.pop %v1277
        %v1279 = vmul.f32 %v1272, 1.442695
        %v1280 = vpow.pop %v1279
        %v1281 = vrot.slane %v1274, 4
        %v1282 = vadd.f32 %v1274, %v1281
        %v1283 = vrot.slane %v1282, 2
        %v1284 = vadd.f32 %v1282, %v1283
        %v1285 = vrot.slane %v1284, 1
        %v1286 = vadd.f32 %v1284, %v1285
        %v1287 = vrot.slane %v1276, 4
        %v1288 = vadd.f32 %v1276, %v1287
        %v1289 = vrot.slane %v1288, 2
        %v1290 = vadd.f32 %v1288, %v1289
        %v1291 = vrot.slane %v1290, 1
        %v1292 = vadd.f32 %v1290, %v1291
        %v1293 = vrot.slane %v1278, 4
        %v1294 = vadd.f32 %v1278, %v1293
        %v1295 = vrot.slane %v1294, 2
        %v1296 = vadd.f32 %v1294, %v1295
        %v1297 = vrot.slane %v1296, 1
        %v1298 = vadd.f32 %v1296, %v1297
        %v1299 = vrot.slane %v1280, 4
        %v1300 = vadd.f32 %v1280, %v1299
        %v1301 = vrot.slane %v1300, 2
        %v1302 = vadd.f32 %v1300, %v1301
        %v1303 = vrot.slane %v1302, 1
        %v1304 = vadd.f32 %v1302, %v1303
        %v1305 = vlog2.pop %v1286
        %v1306 = vmul.f32 %v1305, 0.6931472
        %v1307 = vlog2.pop %v1292
        %v1308 = vmul.f32 %v1307, 0.6931472
        %v1309 = vlog2.pop %v1298
        %v1310 = vmul.f32 %v1309, 0.6931472
        %v1311 = vlog2.pop %v1304
        %v1312 = vmul.f32 %v1311, 0.6931472
        %v1313 = vsub.f32 %v1269, %v1306
        %v1314 = vsub.f32 %v1270, %v1308
        %v1315 = vsub.f32 %v1271, %v1310
        %v1316 = vsub.f32 %v1272, %v1312
        %1317 = vst [vmem:[%s298] sm:$0xff] %v1313
        %1318 = vst [vmem:[%s298 + $0x8] sm:$0xff] %v1314
        %1319 = vst [vmem:[%s298 + $0x10] sm:$0xff] %v1315
        %1320 = vst [vmem:[%s298 + $0x18] sm:$0xff] %v1316
        %s1321 = sand.u32 %s168, 1
        %s1322 = scalar_lea.sflag [#allocation4], %s1321
        %s1323 = sand.u32 %s168, 1
        %s1324 = smul.addr %s1323, 32
        %s1325 = scalar_lea.vmem [#allocation7], %s1324
        // Predicated region
        $region53: #{tpu_custom_call.1} parent=43 // pred_check
          %p1326 = pneg %p178
        $region54: #{tpu_custom_call.1} parent=43 // pred_check_branch
          %1328 = sbr.rel (%p1326) target = $region56
        $region55: #{tpu_custom_call.1} parent=43 // pred_region
          %s1329 = smul.u32 4, %s24
          %s1331 = ssub.s32 512, 512
          %1332 = vsyncadd %s1322, %s1331
          %s1333 = smul.addr %s1329, 128
          %s1334 = scalar_lea.hbm %s6, %s1333
          %s1336 = sshll.u32 %s1325, 4
          %s1337 = int_to_ptr.vmem [resolvable:$true] %s1336
          %1339 = dma.vmem_to_hbm [thread:$0]  %s1337, 512, %s1334, %s1322
        $region56: #{tpu_custom_call.1} parent=43 // pred_fallthru
          _
      $region44: #{tpu_custom_call.1} parent=5 // pred_fallthru
        _
      %p1340 = scmp.le.s32.totalorder 2, %s19
      // Predicated region
      $region57: #{tpu_custom_call.1} parent=5 // pred_check
        %p1341 = pneg %p1340
      $region58: #{tpu_custom_call.1} parent=5 // pred_check_branch
        %1343 = sbr.rel (%p1341) target = $region60
      $region59: #{tpu_custom_call.1} parent=5 // pred_region
        %s1344 = ssub.s32 %s19, 2
        // Predicated region
        $region61: #{tpu_custom_call.1} parent=59 // pred_check
          %p1345 = pneg %p184
        $region62: #{tpu_custom_call.1} parent=59 // pred_check_branch
          %1347 = sbr.rel (%p1345) target = $region64
        $region63: #{tpu_custom_call.1} parent=59 // pred_region
          %s1348 = sand.u32 %s169, 1
          %s1349 = scalar_lea.sflag [#allocation4], %s1348
          %s1350 = sand.u32 %s169, 1
          %s1351 = smul.addr %s1350, 32
          %s1352 = scalar_lea.vmem [#allocation7], %s1351
          %1353 = dma.done %s1349, 512
        $region64: #{tpu_custom_call.1} parent=59 // pred_fallthru
          _
      $region60: #{tpu_custom_call.1} parent=5 // pred_fallthru
        _
    $region6: #{tpu_custom_call.1} parent=1 // loop_footer
      %s23 = sadd.s32 1, %s19
    $region7: #{tpu_custom_call.1} parent=1 // loop_footer_branch
      %18 = sbr.rel target = $region3
    $region8: #{tpu_custom_call.1} parent=1 // loop_exit
      _
    %1354 = vsyncpa [#allocation3], 1
    %s1355 = scalar_lea.sflag [#allocation3], 1
    %1356 = vsyncpa %s1355, 1
    %1357 = vsyncpa [#allocation6], 1
    %s1358 = scalar_lea.sflag [#allocation6], 1
    %1359 = vsyncpa %s1358, 1
    %1360 = vsyncpa [#allocation4], 1
    %s1361 = scalar_lea.sflag [#allocation4], 1
    %1362 = vsyncpa %s1361, 1

</llo_original>
